<compile_context>
chip_gen: v5e
topology: v5e:2x2
jax: 0.10.0
libtpu: 0.0.40
codegen_flags: <defaults>
</compile_context>

<pallas_src>
import jax
import jax.numpy as jnp
from jax.experimental import pallas as pl
from jax.experimental.pallas import tpu as pltpu

HIDDEN = 20
INPUT = 10
NUM_LAYERS = 2
OUTPUT = 1
B_PAD = 8  # one full sublane tile


def gru_kernel(xs_ref, h0_ref, w_ref, b_ref, hn_ref):
    # xs_ref : (T*Bp, H)  time-major flattened input, lanes INPUT:H zero-padded
    # h0_ref : (L, Bp, H) initial hidden state (rows B:Bp zero-padded)
    # w_ref  : (4, H, 3H) packed gate weights: [w0i(pad), w0h, w1i, w1h],
    #                      columns are gates r|z|n, pre-transposed to (in, out)
    # b_ref  : (L, 2, 3H) row 0 = [b_r_fold | b_z_fold | bih_n] (added to gi),
    #                      row 1 = [bhh_n | 0 | 0]
    # hn_ref : (L, Bp, H) final hidden state
    Bp = h0_ref.shape[1]
    T = xs_ref.shape[0] // Bp
    H = HIDDEN

    def dot(a, b):
        return jnp.dot(a, b, preferred_element_type=jnp.float32)

    w0i, w0h, w1i, w1h = w_ref[0], w_ref[1], w_ref[2], w_ref[3]
    b0 = b_ref[0]
    b1 = b_ref[1]
    b0_gi = b0[0:1, :]          # (1, 3H)
    b0_hn = b0[1:2, 0:H]        # (1, H)
    b1_gi = b1[0:1, :]
    b1_hn = b1[1:2, 0:H]

    # Batched layer-0 input projection for all T*Bp rows: ONE packed dot
    # (fully parallel, off the serial recurrence chain).
    gi0 = dot(xs_ref[...], w0i) + b0_gi          # (T*Bp, 3H)

    h_l0 = h0_ref[0]                             # (Bp, H)
    h_l1 = h0_ref[1]

    # Fused two-layer recurrence, statically unrolled over T.
    for t in range(T):
        lo = t * Bp                              # tile-aligned (multiple of 8)
        gi0_t = gi0[lo:lo + Bp]                  # (Bp, 3H)

        # Independent-first: only needs previous-step h_l1 -> overlaps with
        # the layer-0 activation chain below.
        gh1 = dot(h_l1, w1h)                     # (Bp, 3H)

        # ---- layer 0 ----
        gh0 = dot(h_l0, w0h)                     # (Bp, 3H)
        g0 = gi0_t + gh0
        rz0 = jax.nn.sigmoid(g0[:, 0:2 * H])     # one EUP pass for r|z
        r0 = rz0[:, 0:H]
        z0 = rz0[:, H:2 * H]
        n0 = jnp.tanh(gi0_t[:, 2 * H:] + r0 * (gh0[:, 2 * H:] + b0_hn))
        h_l0 = n0 + z0 * (h_l0 - n0)

        # ---- layer 1 (input is this step's layer-0 output) ----
        gi1 = dot(h_l0, w1i) + b1_gi
        g1 = gi1 + gh1
        rz1 = jax.nn.sigmoid(g1[:, 0:2 * H])
        r1 = rz1[:, 0:H]
        z1 = rz1[:, H:2 * H]
        n1 = jnp.tanh(gi1[:, 2 * H:] + r1 * (gh1[:, 2 * H:] + b1_hn))
        h_l1 = n1 + z1 * (h_l1 - n1)

    hn_ref[0] = h_l0
    hn_ref[1] = h_l1


def pack_params(params):
    """One-time packing of GRU weights/biases into two kernel slabs."""
    H = HIDDEN

    def gates_t(w):
        # PyTorch packs gates as rows [r; z; n] of shape (3H, d).
        # -> (d, 3H): pre-transposed, gates concatenated along output lanes.
        return jnp.concatenate([w[0:H].T, w[H:2 * H].T, w[2 * H:3 * H].T], axis=1)

    w0i = jnp.pad(gates_t(params['wih0']), ((0, H - INPUT), (0, 0)))   # (H, 3H)
    w_slab = jnp.stack([w0i,
                        gates_t(params['whh0']),
                        gates_t(params['wih1']),
                        gates_t(params['whh1'])]).astype(jnp.float32)  # (4, H, 3H)

    def bias_rows(bih, bhh):
        gi = jnp.concatenate([bih[0:H] + bhh[0:H],
                              bih[H:2 * H] + bhh[H:2 * H],
                              bih[2 * H:3 * H]])                       # (3H,)
        hn = jnp.pad(bhh[2 * H:3 * H], (0, 2 * H))                     # (3H,)
        return jnp.stack([gi, hn])                                     # (2, 3H)

    b_slab = jnp.stack([bias_rows(params['bih0'], params['bhh0']),
                        bias_rows(params['bih1'], params['bhh1'])]).astype(jnp.float32)

    return {'w': w_slab, 'b': b_slab,
            'fcw_t': params['fcw'].T.astype(jnp.float32),
            'fcb': params['fcb'].astype(jnp.float32)}


def gru_model_forward(x, h0, packed):
    """x: (B, T, I) f32, h0: (L, B, H) f32 -> (out (B, O), hn (L, B, H))."""
    B, T, I = x.shape
    L, _, H = h0.shape
    assert L == NUM_LAYERS and I == INPUT and H == HIDDEN and B <= B_PAD

    # Time-major; pad batch to one full sublane tile and the input lane dim
    # to H (zero rows of the packed w0i slab make the extra lanes no-ops).
    xs = jnp.transpose(x, (1, 0, 2)).astype(jnp.float32)               # (T, B, I)
    xs = jnp.pad(xs, ((0, 0), (0, B_PAD - B), (0, H - I))).reshape(T * B_PAD, H)
    h0p = jnp.pad(h0.astype(jnp.float32), ((0, 0), (0, B_PAD - B), (0, 0)))

    vmem = pl.BlockSpec(memory_space=pltpu.MemorySpace.VMEM)
    hn = pl.pallas_call(
        gru_kernel,
        out_shape=jax.ShapeDtypeStruct((L, B_PAD, H), jnp.float32),
        in_specs=[vmem] * 4,
        out_specs=vmem,
    )(xs, h0p, packed['w'], packed['b'])

    hn = hn[:, :B, :]
    # Linear head on the last top-layer hidden state (== out[:, -1, :]).
    out = hn[1] @ packed['fcw_t'] + packed['fcb']
    return out, hn


def init_params(key):
    """Deterministic init matching PyTorch GRU/Linear shapes (uniform +-1/sqrt(H))."""
    k = 1.0 / (HIDDEN ** 0.5)
    keys = jax.random.split(key, 10)

    def u(kk, shape):
        return jax.random.uniform(kk, shape, jnp.float32, -k, k)

    return {
        'wih0': u(keys[0], (3 * HIDDEN, INPUT)),
        'whh0': u(keys[1], (3 * HIDDEN, HIDDEN)),
        'bih0': u(keys[2], (3 * HIDDEN,)),
        'bhh0': u(keys[3], (3 * HIDDEN,)),
        'wih1': u(keys[4], (3 * HIDDEN, HIDDEN)),
        'whh1': u(keys[5], (3 * HIDDEN, HIDDEN)),
        'bih1': u(keys[6], (3 * HIDDEN,)),
        'bhh1': u(keys[7], (3 * HIDDEN,)),
        'fcw': u(keys[8], (OUTPUT, HIDDEN)),
        'fcb': u(keys[9], (OUTPUT,)),
    }


def reference_forward(x, h0, params):
    """Pure-JAX replica of the PyTorch forward (for correctness check)."""
    H = HIDDEN
    T = x.shape[1]

    def cell(x_t, h, wih, whh, bih, bhh):
        gi = x_t @ wih.T + bih
        gh = h @ whh.T + bhh
        r = jax.nn.sigmoid(gi[:, :H] + gh[:, :H])
        z = jax.nn.sigmoid(gi[:, H:2 * H] + gh[:, H:2 * H])
        n = jnp.tanh(gi[:, 2 * H:] + r * gh[:, 2 * H:])
        return (1.0 - z) * n + z * h

    h_l0, h_l1 = h0[0], h0[1]
    for t in range(T):
        h_l0 = cell(x[:, t, :], h_l0, params['wih0'], params['whh0'],
                    params['bih0'], params['bhh0'])
        h_l1 = cell(h_l0, h_l1, params['wih1'], params['whh1'],
                    params['bih1'], params['bhh1'])
    out = h_l1 @ params['fcw'].T + params['fcb']
    hn = jnp.stack([h_l0, h_l1])
    return out, hn


if __name__ == "__main__":
    key = jax.random.PRNGKey(0)
    k_param, k_x, k_h = jax.random.split(key, 3)

    B, T = 2, 8
    params = init_params(k_param)
    packed = jax.tree_util.tree_map(jnp.asarray, pack_params(params))  # pack ONCE
    x = jax.random.normal(k_x, (B, T, INPUT), jnp.float32)
    h0 = jax.random.normal(k_h, (NUM_LAYERS, B, HIDDEN), jnp.float32)

    fwd = jax.jit(gru_model_forward)
    out, hn = fwd(x, h0, packed)
    out = jax.block_until_ready(out)
    hn = jax.block_until_ready(hn)

    out_ref, hn_ref = reference_forward(x, h0, params)
    assert out.shape == (B, OUTPUT) and hn.shape == (NUM_LAYERS, B, HIDDEN)
    assert jnp.allclose(out, out_ref, rtol=1e-3, atol=1e-4)
    assert jnp.allclose(hn, hn_ref, rtol=1e-3, atol=1e-4)

    print("KERNEL_OK")
</pallas_src>

<mosaic_0001>
module attributes {stable_mosaic.version = 11 : i64} {
  func.func @gru_kernel(%arg0: memref<64x20xf32, #tpu.memory_space<vmem>>, %arg1: memref<2x8x20xf32, #tpu.memory_space<vmem>>, %arg2: memref<4x20x60xf32, #tpu.memory_space<vmem>>, %arg3: memref<2x2x60xf32, #tpu.memory_space<vmem>>, %arg4: memref<2x8x20xf32, #tpu.memory_space<vmem>>) attributes {dimension_semantics = [], scalar_prefetch = 0 : i64, scratch_operands = 0 : i64, tpu.core_type = #tpu.core_type<tc>} {
    %c0 = arith.constant 0 : index
    %c0_0 = arith.constant 0 : index
    %c0_1 = arith.constant 0 : index
    %0 = vector.load %arg2[%c0, %c0_0, %c0_1] : memref<4x20x60xf32, #tpu.memory_space<vmem>>, vector<1x20x60xf32>
    %1 = vector.shape_cast %0 : vector<1x20x60xf32> to vector<20x60xf32>
    %c1 = arith.constant 1 : index
    %c0_2 = arith.constant 0 : index
    %c0_3 = arith.constant 0 : index
    %2 = vector.load %arg2[%c1, %c0_2, %c0_3] : memref<4x20x60xf32, #tpu.memory_space<vmem>>, vector<1x20x60xf32>
    %3 = vector.shape_cast %2 : vector<1x20x60xf32> to vector<20x60xf32>
    %c2 = arith.constant 2 : index
    %c0_4 = arith.constant 0 : index
    %c0_5 = arith.constant 0 : index
    %4 = vector.load %arg2[%c2, %c0_4, %c0_5] : memref<4x20x60xf32, #tpu.memory_space<vmem>>, vector<1x20x60xf32>
    %5 = vector.shape_cast %4 : vector<1x20x60xf32> to vector<20x60xf32>
    %c3 = arith.constant 3 : index
    %c0_6 = arith.constant 0 : index
    %c0_7 = arith.constant 0 : index
    %6 = vector.load %arg2[%c3, %c0_6, %c0_7] : memref<4x20x60xf32, #tpu.memory_space<vmem>>, vector<1x20x60xf32>
    %7 = vector.shape_cast %6 : vector<1x20x60xf32> to vector<20x60xf32>
    %c0_8 = arith.constant 0 : index
    %c0_9 = arith.constant 0 : index
    %c0_10 = arith.constant 0 : index
    %8 = vector.load %arg3[%c0_8, %c0_9, %c0_10] : memref<2x2x60xf32, #tpu.memory_space<vmem>>, vector<1x2x60xf32>
    %9 = vector.shape_cast %8 : vector<1x2x60xf32> to vector<2x60xf32>
    %c1_11 = arith.constant 1 : index
    %c0_12 = arith.constant 0 : index
    %c0_13 = arith.constant 0 : index
    %10 = vector.load %arg3[%c1_11, %c0_12, %c0_13] : memref<2x2x60xf32, #tpu.memory_space<vmem>>, vector<1x2x60xf32>
    %11 = vector.shape_cast %10 : vector<1x2x60xf32> to vector<2x60xf32>
    %12 = vector.extract_strided_slice %9 {offsets = [0, 0], sizes = [1, 60], strides = [1, 1]} : vector<2x60xf32> to vector<1x60xf32>
    %13 = vector.extract_strided_slice %9 {offsets = [1, 0], sizes = [1, 20], strides = [1, 1]} : vector<2x60xf32> to vector<1x20xf32>
    %14 = vector.extract_strided_slice %11 {offsets = [0, 0], sizes = [1, 60], strides = [1, 1]} : vector<2x60xf32> to vector<1x60xf32>
    %15 = vector.extract_strided_slice %11 {offsets = [1, 0], sizes = [1, 20], strides = [1, 1]} : vector<2x60xf32> to vector<1x20xf32>
    %c0_14 = arith.constant 0 : index
    %c0_15 = arith.constant 0 : index
    %16 = vector.load %arg0[%c0_14, %c0_15] : memref<64x20xf32, #tpu.memory_space<vmem>>, vector<64x20xf32>
    %cst = arith.constant dense<0.000000e+00> : vector<64x60xf32>
    %17 = tpu.matmul %16, %1, %cst {dimension_numbers = #tpu.dot_dimension_numbers<[1], [0], [0], [1], [0, 0, 1, 1], [], []>} : vector<64x20xf32>, vector<20x60xf32>, vector<64x60xf32> -> vector<64x60xf32>
    %18 = vector.broadcast %12 : vector<1x60xf32> to vector<64x60xf32>
    %19 = arith.addf %17, %18 : vector<64x60xf32>
    %c0_16 = arith.constant 0 : index
    %c0_17 = arith.constant 0 : index
    %c0_18 = arith.constant 0 : index
    %20 = vector.load %arg1[%c0_16, %c0_17, %c0_18] : memref<2x8x20xf32, #tpu.memory_space<vmem>>, vector<1x8x20xf32>
    %21 = vector.shape_cast %20 : vector<1x8x20xf32> to vector<8x20xf32>
    %c1_19 = arith.constant 1 : index
    %c0_20 = arith.constant 0 : index
    %c0_21 = arith.constant 0 : index
    %22 = vector.load %arg1[%c1_19, %c0_20, %c0_21] : memref<2x8x20xf32, #tpu.memory_space<vmem>>, vector<1x8x20xf32>
    %23 = vector.shape_cast %22 : vector<1x8x20xf32> to vector<8x20xf32>
    %24 = vector.extract_strided_slice %19 {offsets = [0, 0], sizes = [8, 60], strides = [1, 1]} : vector<64x60xf32> to vector<8x60xf32>
    %cst_22 = arith.constant dense<0.000000e+00> : vector<8x60xf32>
    %25 = tpu.matmul %23, %7, %cst_22 {dimension_numbers = #tpu.dot_dimension_numbers<[1], [0], [0], [1], [0, 0, 1, 1], [], []>} : vector<8x20xf32>, vector<20x60xf32>, vector<8x60xf32> -> vector<8x60xf32>
    %cst_23 = arith.constant dense<0.000000e+00> : vector<8x60xf32>
    %26 = tpu.matmul %21, %3, %cst_23 {dimension_numbers = #tpu.dot_dimension_numbers<[1], [0], [0], [1], [0, 0, 1, 1], [], []>} : vector<8x20xf32>, vector<20x60xf32>, vector<8x60xf32> -> vector<8x60xf32>
    %27 = arith.addf %24, %26 : vector<8x60xf32>
    %28 = vector.extract_strided_slice %27 {offsets = [0, 0], sizes = [8, 40], strides = [1, 1]} : vector<8x60xf32> to vector<8x40xf32>
    %29 = arith.negf %28 : vector<8x40xf32>
    %30 = math.exp %29 : vector<8x40xf32>
    %cst_24 = arith.constant 1.000000e+00 : f32
    %31 = vector.broadcast %cst_24 : f32 to vector<8x40xf32>
    %32 = arith.addf %31, %30 : vector<8x40xf32>
    %33 = arith.divf %31, %32 : vector<8x40xf32>
    %34 = vector.extract_strided_slice %33 {offsets = [0, 0], sizes = [8, 20], strides = [1, 1]} : vector<8x40xf32> to vector<8x20xf32>
    %35 = vector.extract_strided_slice %33 {offsets = [0, 20], sizes = [8, 20], strides = [1, 1]} : vector<8x40xf32> to vector<8x20xf32>
    %36 = vector.extract_strided_slice %24 {offsets = [0, 40], sizes = [8, 20], strides = [1, 1]} : vector<8x60xf32> to vector<8x20xf32>
    %37 = vector.extract_strided_slice %26 {offsets = [0, 40], sizes = [8, 20], strides = [1, 1]} : vector<8x60xf32> to vector<8x20xf32>
    %38 = vector.broadcast %13 : vector<1x20xf32> to vector<8x20xf32>
    %39 = arith.addf %37, %38 : vector<8x20xf32>
    %40 = arith.mulf %34, %39 : vector<8x20xf32>
    %41 = arith.addf %36, %40 : vector<8x20xf32>
    %42 = math.tanh %41 : vector<8x20xf32>
    %43 = arith.subf %21, %42 : vector<8x20xf32>
    %44 = arith.mulf %35, %43 : vector<8x20xf32>
    %45 = arith.addf %42, %44 : vector<8x20xf32>
    %cst_25 = arith.constant dense<0.000000e+00> : vector<8x60xf32>
    %46 = tpu.matmul %45, %5, %cst_25 {dimension_numbers = #tpu.dot_dimension_numbers<[1], [0], [0], [1], [0, 0, 1, 1], [], []>} : vector<8x20xf32>, vector<20x60xf32>, vector<8x60xf32> -> vector<8x60xf32>
    %47 = vector.broadcast %14 : vector<1x60xf32> to vector<8x60xf32>
    %48 = arith.addf %46, %47 : vector<8x60xf32>
    %49 = arith.addf %48, %25 : vector<8x60xf32>
    %50 = vector.extract_strided_slice %49 {offsets = [0, 0], sizes = [8, 40], strides = [1, 1]} : vector<8x60xf32> to vector<8x40xf32>
    %51 = arith.negf %50 : vector<8x40xf32>
    %52 = math.exp %51 : vector<8x40xf32>
    %cst_26 = arith.constant 1.000000e+00 : f32
    %53 = vector.broadcast %cst_26 : f32 to vector<8x40xf32>
    %54 = arith.addf %53, %52 : vector<8x40xf32>
    %55 = arith.divf %53, %54 : vector<8x40xf32>
    %56 = vector.extract_strided_slice %55 {offsets = [0, 0], sizes = [8, 20], strides = [1, 1]} : vector<8x40xf32> to vector<8x20xf32>
    %57 = vector.extract_strided_slice %55 {offsets = [0, 20], sizes = [8, 20], strides = [1, 1]} : vector<8x40xf32> to vector<8x20xf32>
    %58 = vector.extract_strided_slice %48 {offsets = [0, 40], sizes = [8, 20], strides = [1, 1]} : vector<8x60xf32> to vector<8x20xf32>
    %59 = vector.extract_strided_slice %25 {offsets = [0, 40], sizes = [8, 20], strides = [1, 1]} : vector<8x60xf32> to vector<8x20xf32>
    %60 = vector.broadcast %15 : vector<1x20xf32> to vector<8x20xf32>
    %61 = arith.addf %59, %60 : vector<8x20xf32>
    %62 = arith.mulf %56, %61 : vector<8x20xf32>
    %63 = arith.addf %58, %62 : vector<8x20xf32>
    %64 = math.tanh %63 : vector<8x20xf32>
    %65 = arith.subf %23, %64 : vector<8x20xf32>
    %66 = arith.mulf %57, %65 : vector<8x20xf32>
    %67 = arith.addf %64, %66 : vector<8x20xf32>
    %68 = vector.extract_strided_slice %19 {offsets = [8, 0], sizes = [8, 60], strides = [1, 1]} : vector<64x60xf32> to vector<8x60xf32>
    %cst_27 = arith.constant dense<0.000000e+00> : vector<8x60xf32>
    %69 = tpu.matmul %67, %7, %cst_27 {dimension_numbers = #tpu.dot_dimension_numbers<[1], [0], [0], [1], [0, 0, 1, 1], [], []>} : vector<8x20xf32>, vector<20x60xf32>, vector<8x60xf32> -> vector<8x60xf32>
    %cst_28 = arith.constant dense<0.000000e+00> : vector<8x60xf32>
    %70 = tpu.matmul %45, %3, %cst_28 {dimension_numbers = #tpu.dot_dimension_numbers<[1], [0], [0], [1], [0, 0, 1, 1], [], []>} : vector<8x20xf32>, vector<20x60xf32>, vector<8x60xf32> -> vector<8x60xf32>
    %71 = arith.addf %68, %70 : vector<8x60xf32>
    %72 = vector.extract_strided_slice %71 {offsets = [0, 0], sizes = [8, 40], strides = [1, 1]} : vector<8x60xf32> to vector<8x40xf32>
    %73 = arith.negf %72 : vector<8x40xf32>
    %74 = math.exp %73 : vector<8x40xf32>
    %cst_29 = arith.constant 1.000000e+00 : f32
    %75 = vector.broadcast %cst_29 : f32 to vector<8x40xf32>
    %76 = arith.addf %75, %74 : vector<8x40xf32>
    %77 = arith.divf %75, %76 : vector<8x40xf32>
    %78 = vector.extract_strided_slice %77 {offsets = [0, 0], sizes = [8, 20], strides = [1, 1]} : vector<8x40xf32> to vector<8x20xf32>
    %79 = vector.extract_strided_slice %77 {offsets = [0, 20], sizes = [8, 20], strides = [1, 1]} : vector<8x40xf32> to vector<8x20xf32>
    %80 = vector.extract_strided_slice %68 {offsets = [0, 40], sizes = [8, 20], strides = [1, 1]} : vector<8x60xf32> to vector<8x20xf32>
    %81 = vector.extract_strided_slice %70 {offsets = [0, 40], sizes = [8, 20], strides = [1, 1]} : vector<8x60xf32> to vector<8x20xf32>
    %82 = vector.broadcast %13 : vector<1x20xf32> to vector<8x20xf32>
    %83 = arith.addf %81, %82 : vector<8x20xf32>
    %84 = arith.mulf %78, %83 : vector<8x20xf32>
    %85 = arith.addf %80, %84 : vector<8x20xf32>
    %86 = math.tanh %85 : vector<8x20xf32>
    %87 = arith.subf %45, %86 : vector<8x20xf32>
    %88 = arith.mulf %79, %87 : vector<8x20xf32>
    %89 = arith.addf %86, %88 : vector<8x20xf32>
    %cst_30 = arith.constant dense<0.000000e+00> : vector<8x60xf32>
    %90 = tpu.matmul %89, %5, %cst_30 {dimension_numbers = #tpu.dot_dimension_numbers<[1], [0], [0], [1], [0, 0, 1, 1], [], []>} : vector<8x20xf32>, vector<20x60xf32>, vector<8x60xf32> -> vector<8x60xf32>
    %91 = vector.broadcast %14 : vector<1x60xf32> to vector<8x60xf32>
    %92 = arith.addf %90, %91 : vector<8x60xf32>
    %93 = arith.addf %92, %69 : vector<8x60xf32>
    %94 = vector.extract_strided_slice %93 {offsets = [0, 0], sizes = [8, 40], strides = [1, 1]} : vector<8x60xf32> to vector<8x40xf32>
    %95 = arith.negf %94 : vector<8x40xf32>
    %96 = math.exp %95 : vector<8x40xf32>
    %cst_31 = arith.constant 1.000000e+00 : f32
    %97 = vector.broadcast %cst_31 : f32 to vector<8x40xf32>
    %98 = arith.addf %97, %96 : vector<8x40xf32>
    %99 = arith.divf %97, %98 : vector<8x40xf32>
    %100 = vector.extract_strided_slice %99 {offsets = [0, 0], sizes = [8, 20], strides = [1, 1]} : vector<8x40xf32> to vector<8x20xf32>
    %101 = vector.extract_strided_slice %99 {offsets = [0, 20], sizes = [8, 20], strides = [1, 1]} : vector<8x40xf32> to vector<8x20xf32>
    %102 = vector.extract_strided_slice %92 {offsets = [0, 40], sizes = [8, 20], strides = [1, 1]} : vector<8x60xf32> to vector<8x20xf32>
    %103 = vector.extract_strided_slice %69 {offsets = [0, 40], sizes = [8, 20], strides = [1, 1]} : vector<8x60xf32> to vector<8x20xf32>
    %104 = vector.broadcast %15 : vector<1x20xf32> to vector<8x20xf32>
    %105 = arith.addf %103, %104 : vector<8x20xf32>
    %106 = arith.mulf %100, %105 : vector<8x20xf32>
    %107 = arith.addf %102, %106 : vector<8x20xf32>
    %108 = math.tanh %107 : vector<8x20xf32>
    %109 = arith.subf %67, %108 : vector<8x20xf32>
    %110 = arith.mulf %101, %109 : vector<8x20xf32>
    %111 = arith.addf %108, %110 : vector<8x20xf32>
    %112 = vector.extract_strided_slice %19 {offsets = [16, 0], sizes = [8, 60], strides = [1, 1]} : vector<64x60xf32> to vector<8x60xf32>
    %cst_32 = arith.constant dense<0.000000e+00> : vector<8x60xf32>
    %113 = tpu.matmul %111, %7, %cst_32 {dimension_numbers = #tpu.dot_dimension_numbers<[1], [0], [0], [1], [0, 0, 1, 1], [], []>} : vector<8x20xf32>, vector<20x60xf32>, vector<8x60xf32> -> vector<8x60xf32>
    %cst_33 = arith.constant dense<0.000000e+00> : vector<8x60xf32>
    %114 = tpu.matmul %89, %3, %cst_33 {dimension_numbers = #tpu.dot_dimension_numbers<[1], [0], [0], [1], [0, 0, 1, 1], [], []>} : vector<8x20xf32>, vector<20x60xf32>, vector<8x60xf32> -> vector<8x60xf32>
    %115 = arith.addf %112, %114 : vector<8x60xf32>
    %116 = vector.extract_strided_slice %115 {offsets = [0, 0], sizes = [8, 40], strides = [1, 1]} : vector<8x60xf32> to vector<8x40xf32>
    %117 = arith.negf %116 : vector<8x40xf32>
    %118 = math.exp %117 : vector<8x40xf32>
    %cst_34 = arith.constant 1.000000e+00 : f32
    %119 = vector.broadcast %cst_34 : f32 to vector<8x40xf32>
    %120 = arith.addf %119, %118 : vector<8x40xf32>
    %121 = arith.divf %119, %120 : vector<8x40xf32>
    %122 = vector.extract_strided_slice %121 {offsets = [0, 0], sizes = [8, 20], strides = [1, 1]} : vector<8x40xf32> to vector<8x20xf32>
    %123 = vector.extract_strided_slice %121 {offsets = [0, 20], sizes = [8, 20], strides = [1, 1]} : vector<8x40xf32> to vector<8x20xf32>
    %124 = vector.extract_strided_slice %112 {offsets = [0, 40], sizes = [8, 20], strides = [1, 1]} : vector<8x60xf32> to vector<8x20xf32>
    %125 = vector.extract_strided_slice %114 {offsets = [0, 40], sizes = [8, 20], strides = [1, 1]} : vector<8x60xf32> to vector<8x20xf32>
    %126 = vector.broadcast %13 : vector<1x20xf32> to vector<8x20xf32>
    %127 = arith.addf %125, %126 : vector<8x20xf32>
    %128 = arith.mulf %122, %127 : vector<8x20xf32>
    %129 = arith.addf %124, %128 : vector<8x20xf32>
    %130 = math.tanh %129 : vector<8x20xf32>
    %131 = arith.subf %89, %130 : vector<8x20xf32>
    %132 = arith.mulf %123, %131 : vector<8x20xf32>
    %133 = arith.addf %130, %132 : vector<8x20xf32>
    %cst_35 = arith.constant dense<0.000000e+00> : vector<8x60xf32>
    %134 = tpu.matmul %133, %5, %cst_35 {dimension_numbers = #tpu.dot_dimension_numbers<[1], [0], [0], [1], [0, 0, 1, 1], [], []>} : vector<8x20xf32>, vector<20x60xf32>, vector<8x60xf32> -> vector<8x60xf32>
    %135 = vector.broadcast %14 : vector<1x60xf32> to vector<8x60xf32>
    %136 = arith.addf %134, %135 : vector<8x60xf32>
    %137 = arith.addf %136, %113 : vector<8x60xf32>
    %138 = vector.extract_strided_slice %137 {offsets = [0, 0], sizes = [8, 40], strides = [1, 1]} : vector<8x60xf32> to vector<8x40xf32>
    %139 = arith.negf %138 : vector<8x40xf32>
    %140 = math.exp %139 : vector<8x40xf32>
    %cst_36 = arith.constant 1.000000e+00 : f32
    %141 = vector.broadcast %cst_36 : f32 to vector<8x40xf32>
    %142 = arith.addf %141, %140 : vector<8x40xf32>
    %143 = arith.divf %141, %142 : vector<8x40xf32>
    %144 = vector.extract_strided_slice %143 {offsets = [0, 0], sizes = [8, 20], strides = [1, 1]} : vector<8x40xf32> to vector<8x20xf32>
    %145 = vector.extract_strided_slice %143 {offsets = [0, 20], sizes = [8, 20], strides = [1, 1]} : vector<8x40xf32> to vector<8x20xf32>
    %146 = vector.extract_strided_slice %136 {offsets = [0, 40], sizes = [8, 20], strides = [1, 1]} : vector<8x60xf32> to vector<8x20xf32>
    %147 = vector.extract_strided_slice %113 {offsets = [0, 40], sizes = [8, 20], strides = [1, 1]} : vector<8x60xf32> to vector<8x20xf32>
    %148 = vector.broadcast %15 : vector<1x20xf32> to vector<8x20xf32>
    %149 = arith.addf %147, %148 : vector<8x20xf32>
    %150 = arith.mulf %144, %149 : vector<8x20xf32>
    %151 = arith.addf %146, %150 : vector<8x20xf32>
    %152 = math.tanh %151 : vector<8x20xf32>
    %153 = arith.subf %111, %152 : vector<8x20xf32>
    %154 = arith.mulf %145, %153 : vector<8x20xf32>
    %155 = arith.addf %152, %154 : vector<8x20xf32>
    %156 = vector.extract_strided_slice %19 {offsets = [24, 0], sizes = [8, 60], strides = [1, 1]} : vector<64x60xf32> to vector<8x60xf32>
    %cst_37 = arith.constant dense<0.000000e+00> : vector<8x60xf32>
    %157 = tpu.matmul %155, %7, %cst_37 {dimension_numbers = #tpu.dot_dimension_numbers<[1], [0], [0], [1], [0, 0, 1, 1], [], []>} : vector<8x20xf32>, vector<20x60xf32>, vector<8x60xf32> -> vector<8x60xf32>
    %cst_38 = arith.constant dense<0.000000e+00> : vector<8x60xf32>
    %158 = tpu.matmul %133, %3, %cst_38 {dimension_numbers = #tpu.dot_dimension_numbers<[1], [0], [0], [1], [0, 0, 1, 1], [], []>} : vector<8x20xf32>, vector<20x60xf32>, vector<8x60xf32> -> vector<8x60xf32>
    %159 = arith.addf %156, %158 : vector<8x60xf32>
    %160 = vector.extract_strided_slice %159 {offsets = [0, 0], sizes = [8, 40], strides = [1, 1]} : vector<8x60xf32> to vector<8x40xf32>
    %161 = arith.negf %160 : vector<8x40xf32>
    %162 = math.exp %161 : vector<8x40xf32>
    %cst_39 = arith.constant 1.000000e+00 : f32
    %163 = vector.broadcast %cst_39 : f32 to vector<8x40xf32>
    %164 = arith.addf %163, %162 : vector<8x40xf32>
    %165 = arith.divf %163, %164 : vector<8x40xf32>
    %166 = vector.extract_strided_slice %165 {offsets = [0, 0], sizes = [8, 20], strides = [1, 1]} : vector<8x40xf32> to vector<8x20xf32>
    %167 = vector.extract_strided_slice %165 {offsets = [0, 20], sizes = [8, 20], strides = [1, 1]} : vector<8x40xf32> to vector<8x20xf32>
    %168 = vector.extract_strided_slice %156 {offsets = [0, 40], sizes = [8, 20], strides = [1, 1]} : vector<8x60xf32> to vector<8x20xf32>
    %169 = vector.extract_strided_slice %158 {offsets = [0, 40], sizes = [8, 20], strides = [1, 1]} : vector<8x60xf32> to vector<8x20xf32>
    %170 = vector.broadcast %13 : vector<1x20xf32> to vector<8x20xf32>
    %171 = arith.addf %169, %170 : vector<8x20xf32>
    %172 = arith.mulf %166, %171 : vector<8x20xf32>
    %173 = arith.addf %168, %172 : vector<8x20xf32>
    %174 = math.tanh %173 : vector<8x20xf32>
    %175 = arith.subf %133, %174 : vector<8x20xf32>
    %176 = arith.mulf %167, %175 : vector<8x20xf32>
    %177 = arith.addf %174, %176 : vector<8x20xf32>
    %cst_40 = arith.constant dense<0.000000e+00> : vector<8x60xf32>
    %178 = tpu.matmul %177, %5, %cst_40 {dimension_numbers = #tpu.dot_dimension_numbers<[1], [0], [0], [1], [0, 0, 1, 1], [], []>} : vector<8x20xf32>, vector<20x60xf32>, vector<8x60xf32> -> vector<8x60xf32>
    %179 = vector.broadcast %14 : vector<1x60xf32> to vector<8x60xf32>
    %180 = arith.addf %178, %179 : vector<8x60xf32>
    %181 = arith.addf %180, %157 : vector<8x60xf32>
    %182 = vector.extract_strided_slice %181 {offsets = [0, 0], sizes = [8, 40], strides = [1, 1]} : vector<8x60xf32> to vector<8x40xf32>
    %183 = arith.negf %182 : vector<8x40xf32>
    %184 = math.exp %183 : vector<8x40xf32>
    %cst_41 = arith.constant 1.000000e+00 : f32
    %185 = vector.broadcast %cst_41 : f32 to vector<8x40xf32>
    %186 = arith.addf %185, %184 : vector<8x40xf32>
    %187 = arith.divf %185, %186 : vector<8x40xf32>
    %188 = vector.extract_strided_slice %187 {offsets = [0, 0], sizes = [8, 20], strides = [1, 1]} : vector<8x40xf32> to vector<8x20xf32>
    %189 = vector.extract_strided_slice %187 {offsets = [0, 20], sizes = [8, 20], strides = [1, 1]} : vector<8x40xf32> to vector<8x20xf32>
    %190 = vector.extract_strided_slice %180 {offsets = [0, 40], sizes = [8, 20], strides = [1, 1]} : vector<8x60xf32> to vector<8x20xf32>
    %191 = vector.extract_strided_slice %157 {offsets = [0, 40], sizes = [8, 20], strides = [1, 1]} : vector<8x60xf32> to vector<8x20xf32>
    %192 = vector.broadcast %15 : vector<1x20xf32> to vector<8x20xf32>
    %193 = arith.addf %191, %192 : vector<8x20xf32>
    %194 = arith.mulf %188, %193 : vector<8x20xf32>
    %195 = arith.addf %190, %194 : vector<8x20xf32>
    %196 = math.tanh %195 : vector<8x20xf32>
    %197 = arith.subf %155, %196 : vector<8x20xf32>
    %198 = arith.mulf %189, %197 : vector<8x20xf32>
    %199 = arith.addf %196, %198 : vector<8x20xf32>
    %200 = vector.extract_strided_slice %19 {offsets = [32, 0], sizes = [8, 60], strides = [1, 1]} : vector<64x60xf32> to vector<8x60xf32>
    %cst_42 = arith.constant dense<0.000000e+00> : vector<8x60xf32>
    %201 = tpu.matmul %199, %7, %cst_42 {dimension_numbers = #tpu.dot_dimension_numbers<[1], [0], [0], [1], [0, 0, 1, 1], [], []>} : vector<8x20xf32>, vector<20x60xf32>, vector<8x60xf32> -> vector<8x60xf32>
    %cst_43 = arith.constant dense<0.000000e+00> : vector<8x60xf32>
    %202 = tpu.matmul %177, %3, %cst_43 {dimension_numbers = #tpu.dot_dimension_numbers<[1], [0], [0], [1], [0, 0, 1, 1], [], []>} : vector<8x20xf32>, vector<20x60xf32>, vector<8x60xf32> -> vector<8x60xf32>
    %203 = arith.addf %200, %202 : vector<8x60xf32>
    %204 = vector.extract_strided_slice %203 {offsets = [0, 0], sizes = [8, 40], strides = [1, 1]} : vector<8x60xf32> to vector<8x40xf32>
    %205 = arith.negf %204 : vector<8x40xf32>
    %206 = math.exp %205 : vector<8x40xf32>
    %cst_44 = arith.constant 1.000000e+00 : f32
    %207 = vector.broadcast %cst_44 : f32 to vector<8x40xf32>
    %208 = arith.addf %207, %206 : vector<8x40xf32>
    %209 = arith.divf %207, %208 : vector<8x40xf32>
    %210 = vector.extract_strided_slice %209 {offsets = [0, 0], sizes = [8, 20], strides = [1, 1]} : vector<8x40xf32> to vector<8x20xf32>
    %211 = vector.extract_strided_slice %209 {offsets = [0, 20], sizes = [8, 20], strides = [1, 1]} : vector<8x40xf32> to vector<8x20xf32>
    %212 = vector.extract_strided_slice %200 {offsets = [0, 40], sizes = [8, 20], strides = [1, 1]} : vector<8x60xf32> to vector<8x20xf32>
    %213 = vector.extract_strided_slice %202 {offsets = [0, 40], sizes = [8, 20], strides = [1, 1]} : vector<8x60xf32> to vector<8x20xf32>
    %214 = vector.broadcast %13 : vector<1x20xf32> to vector<8x20xf32>
    %215 = arith.addf %213, %214 : vector<8x20xf32>
    %216 = arith.mulf %210, %215 : vector<8x20xf32>
    %217 = arith.addf %212, %216 : vector<8x20xf32>
    %218 = math.tanh %217 : vector<8x20xf32>
    %219 = arith.subf %177, %218 : vector<8x20xf32>
    %220 = arith.mulf %211, %219 : vector<8x20xf32>
    %221 = arith.addf %218, %220 : vector<8x20xf32>
    %cst_45 = arith.constant dense<0.000000e+00> : vector<8x60xf32>
    %222 = tpu.matmul %221, %5, %cst_45 {dimension_numbers = #tpu.dot_dimension_numbers<[1], [0], [0], [1], [0, 0, 1, 1], [], []>} : vector<8x20xf32>, vector<20x60xf32>, vector<8x60xf32> -> vector<8x60xf32>
    %223 = vector.broadcast %14 : vector<1x60xf32> to vector<8x60xf32>
    %224 = arith.addf %222, %223 : vector<8x60xf32>
    %225 = arith.addf %224, %201 : vector<8x60xf32>
    %226 = vector.extract_strided_slice %225 {offsets = [0, 0], sizes = [8, 40], strides = [1, 1]} : vector<8x60xf32> to vector<8x40xf32>
    %227 = arith.negf %226 : vector<8x40xf32>
    %228 = math.exp %227 : vector<8x40xf32>
    %cst_46 = arith.constant 1.000000e+00 : f32
    %229 = vector.broadcast %cst_46 : f32 to vector<8x40xf32>
    %230 = arith.addf %229, %228 : vector<8x40xf32>
    %231 = arith.divf %229, %230 : vector<8x40xf32>
    %232 = vector.extract_strided_slice %231 {offsets = [0, 0], sizes = [8, 20], strides = [1, 1]} : vector<8x40xf32> to vector<8x20xf32>
    %233 = vector.extract_strided_slice %231 {offsets = [0, 20], sizes = [8, 20], strides = [1, 1]} : vector<8x40xf32> to vector<8x20xf32>
    %234 = vector.extract_strided_slice %224 {offsets = [0, 40], sizes = [8, 20], strides = [1, 1]} : vector<8x60xf32> to vector<8x20xf32>
    %235 = vector.extract_strided_slice %201 {offsets = [0, 40], sizes = [8, 20], strides = [1, 1]} : vector<8x60xf32> to vector<8x20xf32>
    %236 = vector.broadcast %15 : vector<1x20xf32> to vector<8x20xf32>
    %237 = arith.addf %235, %236 : vector<8x20xf32>
    %238 = arith.mulf %232, %237 : vector<8x20xf32>
    %239 = arith.addf %234, %238 : vector<8x20xf32>
    %240 = math.tanh %239 : vector<8x20xf32>
    %241 = arith.subf %199, %240 : vector<8x20xf32>
    %242 = arith.mulf %233, %241 : vector<8x20xf32>
    %243 = arith.addf %240, %242 : vector<8x20xf32>
    %244 = vector.extract_strided_slice %19 {offsets = [40, 0], sizes = [8, 60], strides = [1, 1]} : vector<64x60xf32> to vector<8x60xf32>
    %cst_47 = arith.constant dense<0.000000e+00> : vector<8x60xf32>
    %245 = tpu.matmul %243, %7, %cst_47 {dimension_numbers = #tpu.dot_dimension_numbers<[1], [0], [0], [1], [0, 0, 1, 1], [], []>} : vector<8x20xf32>, vector<20x60xf32>, vector<8x60xf32> -> vector<8x60xf32>
    %cst_48 = arith.constant dense<0.000000e+00> : vector<8x60xf32>
    %246 = tpu.matmul %221, %3, %cst_48 {dimension_numbers = #tpu.dot_dimension_numbers<[1], [0], [0], [1], [0, 0, 1, 1], [], []>} : vector<8x20xf32>, vector<20x60xf32>, vector<8x60xf32> -> vector<8x60xf32>
    %247 = arith.addf %244, %246 : vector<8x60xf32>
    %248 = vector.extract_strided_slice %247 {offsets = [0, 0], sizes = [8, 40], strides = [1, 1]} : vector<8x60xf32> to vector<8x40xf32>
    %249 = arith.negf %248 : vector<8x40xf32>
    %250 = math.exp %249 : vector<8x40xf32>
    %cst_49 = arith.constant 1.000000e+00 : f32
    %251 = vector.broadcast %cst_49 : f32 to vector<8x40xf32>
    %252 = arith.addf %251, %250 : vector<8x40xf32>
    %253 = arith.divf %251, %252 : vector<8x40xf32>
    %254 = vector.extract_strided_slice %253 {offsets = [0, 0], sizes = [8, 20], strides = [1, 1]} : vector<8x40xf32> to vector<8x20xf32>
    %255 = vector.extract_strided_slice %253 {offsets = [0, 20], sizes = [8, 20], strides = [1, 1]} : vector<8x40xf32> to vector<8x20xf32>
    %256 = vector.extract_strided_slice %244 {offsets = [0, 40], sizes = [8, 20], strides = [1, 1]} : vector<8x60xf32> to vector<8x20xf32>
    %257 = vector.extract_strided_slice %246 {offsets = [0, 40], sizes = [8, 20], strides = [1, 1]} : vector<8x60xf32> to vector<8x20xf32>
    %258 = vector.broadcast %13 : vector<1x20xf32> to vector<8x20xf32>
    %259 = arith.addf %257, %258 : vector<8x20xf32>
    %260 = arith.mulf %254, %259 : vector<8x20xf32>
    %261 = arith.addf %256, %260 : vector<8x20xf32>
    %262 = math.tanh %261 : vector<8x20xf32>
    %263 = arith.subf %221, %262 : vector<8x20xf32>
    %264 = arith.mulf %255, %263 : vector<8x20xf32>
    %265 = arith.addf %262, %264 : vector<8x20xf32>
    %cst_50 = arith.constant dense<0.000000e+00> : vector<8x60xf32>
    %266 = tpu.matmul %265, %5, %cst_50 {dimension_numbers = #tpu.dot_dimension_numbers<[1], [0], [0], [1], [0, 0, 1, 1], [], []>} : vector<8x20xf32>, vector<20x60xf32>, vector<8x60xf32> -> vector<8x60xf32>
    %267 = vector.broadcast %14 : vector<1x60xf32> to vector<8x60xf32>
    %268 = arith.addf %266, %267 : vector<8x60xf32>
    %269 = arith.addf %268, %245 : vector<8x60xf32>
    %270 = vector.extract_strided_slice %269 {offsets = [0, 0], sizes = [8, 40], strides = [1, 1]} : vector<8x60xf32> to vector<8x40xf32>
    %271 = arith.negf %270 : vector<8x40xf32>
    %272 = math.exp %271 : vector<8x40xf32>
    %cst_51 = arith.constant 1.000000e+00 : f32
    %273 = vector.broadcast %cst_51 : f32 to vector<8x40xf32>
    %274 = arith.addf %273, %272 : vector<8x40xf32>
    %275 = arith.divf %273, %274 : vector<8x40xf32>
    %276 = vector.extract_strided_slice %275 {offsets = [0, 0], sizes = [8, 20], strides = [1, 1]} : vector<8x40xf32> to vector<8x20xf32>
    %277 = vector.extract_strided_slice %275 {offsets = [0, 20], sizes = [8, 20], strides = [1, 1]} : vector<8x40xf32> to vector<8x20xf32>
    %278 = vector.extract_strided_slice %268 {offsets = [0, 40], sizes = [8, 20], strides = [1, 1]} : vector<8x60xf32> to vector<8x20xf32>
    %279 = vector.extract_strided_slice %245 {offsets = [0, 40], sizes = [8, 20], strides = [1, 1]} : vector<8x60xf32> to vector<8x20xf32>
    %280 = vector.broadcast %15 : vector<1x20xf32> to vector<8x20xf32>
    %281 = arith.addf %279, %280 : vector<8x20xf32>
    %282 = arith.mulf %276, %281 : vector<8x20xf32>
    %283 = arith.addf %278, %282 : vector<8x20xf32>
    %284 = math.tanh %283 : vector<8x20xf32>
    %285 = arith.subf %243, %284 : vector<8x20xf32>
    %286 = arith.mulf %277, %285 : vector<8x20xf32>
    %287 = arith.addf %284, %286 : vector<8x20xf32>
    %288 = vector.extract_strided_slice %19 {offsets = [48, 0], sizes = [8, 60], strides = [1, 1]} : vector<64x60xf32> to vector<8x60xf32>
    %cst_52 = arith.constant dense<0.000000e+00> : vector<8x60xf32>
    %289 = tpu.matmul %287, %7, %cst_52 {dimension_numbers = #tpu.dot_dimension_numbers<[1], [0], [0], [1], [0, 0, 1, 1], [], []>} : vector<8x20xf32>, vector<20x60xf32>, vector<8x60xf32> -> vector<8x60xf32>
    %cst_53 = arith.constant dense<0.000000e+00> : vector<8x60xf32>
    %290 = tpu.matmul %265, %3, %cst_53 {dimension_numbers = #tpu.dot_dimension_numbers<[1], [0], [0], [1], [0, 0, 1, 1], [], []>} : vector<8x20xf32>, vector<20x60xf32>, vector<8x60xf32> -> vector<8x60xf32>
    %291 = arith.addf %288, %290 : vector<8x60xf32>
    %292 = vector.extract_strided_slice %291 {offsets = [0, 0], sizes = [8, 40], strides = [1, 1]} : vector<8x60xf32> to vector<8x40xf32>
    %293 = arith.negf %292 : vector<8x40xf32>
    %294 = math.exp %293 : vector<8x40xf32>
    %cst_54 = arith.constant 1.000000e+00 : f32
    %295 = vector.broadcast %cst_54 : f32 to vector<8x40xf32>
    %296 = arith.addf %295, %294 : vector<8x40xf32>
    %297 = arith.divf %295, %296 : vector<8x40xf32>
    %298 = vector.extract_strided_slice %297 {offsets = [0, 0], sizes = [8, 20], strides = [1, 1]} : vector<8x40xf32> to vector<8x20xf32>
    %299 = vector.extract_strided_slice %297 {offsets = [0, 20], sizes = [8, 20], strides = [1, 1]} : vector<8x40xf32> to vector<8x20xf32>
    %300 = vector.extract_strided_slice %288 {offsets = [0, 40], sizes = [8, 20], strides = [1, 1]} : vector<8x60xf32> to vector<8x20xf32>
    %301 = vector.extract_strided_slice %290 {offsets = [0, 40], sizes = [8, 20], strides = [1, 1]} : vector<8x60xf32> to vector<8x20xf32>
    %302 = vector.broadcast %13 : vector<1x20xf32> to vector<8x20xf32>
    %303 = arith.addf %301, %302 : vector<8x20xf32>
    %304 = arith.mulf %298, %303 : vector<8x20xf32>
    %305 = arith.addf %300, %304 : vector<8x20xf32>
    %306 = math.tanh %305 : vector<8x20xf32>
    %307 = arith.subf %265, %306 : vector<8x20xf32>
    %308 = arith.mulf %299, %307 : vector<8x20xf32>
    %309 = arith.addf %306, %308 : vector<8x20xf32>
    %cst_55 = arith.constant dense<0.000000e+00> : vector<8x60xf32>
    %310 = tpu.matmul %309, %5, %cst_55 {dimension_numbers = #tpu.dot_dimension_numbers<[1], [0], [0], [1], [0, 0, 1, 1], [], []>} : vector<8x20xf32>, vector<20x60xf32>, vector<8x60xf32> -> vector<8x60xf32>
    %311 = vector.broadcast %14 : vector<1x60xf32> to vector<8x60xf32>
    %312 = arith.addf %310, %311 : vector<8x60xf32>
    %313 = arith.addf %312, %289 : vector<8x60xf32>
    %314 = vector.extract_strided_slice %313 {offsets = [0, 0], sizes = [8, 40], strides = [1, 1]} : vector<8x60xf32> to vector<8x40xf32>
    %315 = arith.negf %314 : vector<8x40xf32>
    %316 = math.exp %315 : vector<8x40xf32>
    %cst_56 = arith.constant 1.000000e+00 : f32
    %317 = vector.broadcast %cst_56 : f32 to vector<8x40xf32>
    %318 = arith.addf %317, %316 : vector<8x40xf32>
    %319 = arith.divf %317, %318 : vector<8x40xf32>
    %320 = vector.extract_strided_slice %319 {offsets = [0, 0], sizes = [8, 20], strides = [1, 1]} : vector<8x40xf32> to vector<8x20xf32>
    %321 = vector.extract_strided_slice %319 {offsets = [0, 20], sizes = [8, 20], strides = [1, 1]} : vector<8x40xf32> to vector<8x20xf32>
    %322 = vector.extract_strided_slice %312 {offsets = [0, 40], sizes = [8, 20], strides = [1, 1]} : vector<8x60xf32> to vector<8x20xf32>
    %323 = vector.extract_strided_slice %289 {offsets = [0, 40], sizes = [8, 20], strides = [1, 1]} : vector<8x60xf32> to vector<8x20xf32>
    %324 = vector.broadcast %15 : vector<1x20xf32> to vector<8x20xf32>
    %325 = arith.addf %323, %324 : vector<8x20xf32>
    %326 = arith.mulf %320, %325 : vector<8x20xf32>
    %327 = arith.addf %322, %326 : vector<8x20xf32>
    %328 = math.tanh %327 : vector<8x20xf32>
    %329 = arith.subf %287, %328 : vector<8x20xf32>
    %330 = arith.mulf %321, %329 : vector<8x20xf32>
    %331 = arith.addf %328, %330 : vector<8x20xf32>
    %332 = vector.extract_strided_slice %19 {offsets = [56, 0], sizes = [8, 60], strides = [1, 1]} : vector<64x60xf32> to vector<8x60xf32>
    %cst_57 = arith.constant dense<0.000000e+00> : vector<8x60xf32>
    %333 = tpu.matmul %331, %7, %cst_57 {dimension_numbers = #tpu.dot_dimension_numbers<[1], [0], [0], [1], [0, 0, 1, 1], [], []>} : vector<8x20xf32>, vector<20x60xf32>, vector<8x60xf32> -> vector<8x60xf32>
    %cst_58 = arith.constant dense<0.000000e+00> : vector<8x60xf32>
    %334 = tpu.matmul %309, %3, %cst_58 {dimension_numbers = #tpu.dot_dimension_numbers<[1], [0], [0], [1], [0, 0, 1, 1], [], []>} : vector<8x20xf32>, vector<20x60xf32>, vector<8x60xf32> -> vector<8x60xf32>
    %335 = arith.addf %332, %334 : vector<8x60xf32>
    %336 = vector.extract_strided_slice %335 {offsets = [0, 0], sizes = [8, 40], strides = [1, 1]} : vector<8x60xf32> to vector<8x40xf32>
    %337 = arith.negf %336 : vector<8x40xf32>
    %338 = math.exp %337 : vector<8x40xf32>
    %cst_59 = arith.constant 1.000000e+00 : f32
    %339 = vector.broadcast %cst_59 : f32 to vector<8x40xf32>
    %340 = arith.addf %339, %338 : vector<8x40xf32>
    %341 = arith.divf %339, %340 : vector<8x40xf32>
    %342 = vector.extract_strided_slice %341 {offsets = [0, 0], sizes = [8, 20], strides = [1, 1]} : vector<8x40xf32> to vector<8x20xf32>
    %343 = vector.extract_strided_slice %341 {offsets = [0, 20], sizes = [8, 20], strides = [1, 1]} : vector<8x40xf32> to vector<8x20xf32>
    %344 = vector.extract_strided_slice %332 {offsets = [0, 40], sizes = [8, 20], strides = [1, 1]} : vector<8x60xf32> to vector<8x20xf32>
    %345 = vector.extract_strided_slice %334 {offsets = [0, 40], sizes = [8, 20], strides = [1, 1]} : vector<8x60xf32> to vector<8x20xf32>
    %346 = vector.broadcast %13 : vector<1x20xf32> to vector<8x20xf32>
    %347 = arith.addf %345, %346 : vector<8x20xf32>
    %348 = arith.mulf %342, %347 : vector<8x20xf32>
    %349 = arith.addf %344, %348 : vector<8x20xf32>
    %350 = math.tanh %349 : vector<8x20xf32>
    %351 = arith.subf %309, %350 : vector<8x20xf32>
    %352 = arith.mulf %343, %351 : vector<8x20xf32>
    %353 = arith.addf %350, %352 : vector<8x20xf32>
    %cst_60 = arith.constant dense<0.000000e+00> : vector<8x60xf32>
    %354 = tpu.matmul %353, %5, %cst_60 {dimension_numbers = #tpu.dot_dimension_numbers<[1], [0], [0], [1], [0, 0, 1, 1], [], []>} : vector<8x20xf32>, vector<20x60xf32>, vector<8x60xf32> -> vector<8x60xf32>
    %355 = vector.broadcast %14 : vector<1x60xf32> to vector<8x60xf32>
    %356 = arith.addf %354, %355 : vector<8x60xf32>
    %357 = arith.addf %356, %333 : vector<8x60xf32>
    %358 = vector.extract_strided_slice %357 {offsets = [0, 0], sizes = [8, 40], strides = [1, 1]} : vector<8x60xf32> to vector<8x40xf32>
    %359 = arith.negf %358 : vector<8x40xf32>
    %360 = math.exp %359 : vector<8x40xf32>
    %cst_61 = arith.constant 1.000000e+00 : f32
    %361 = vector.broadcast %cst_61 : f32 to vector<8x40xf32>
    %362 = arith.addf %361, %360 : vector<8x40xf32>
    %363 = arith.divf %361, %362 : vector<8x40xf32>
    %364 = vector.extract_strided_slice %363 {offsets = [0, 0], sizes = [8, 20], strides = [1, 1]} : vector<8x40xf32> to vector<8x20xf32>
    %365 = vector.extract_strided_slice %363 {offsets = [0, 20], sizes = [8, 20], strides = [1, 1]} : vector<8x40xf32> to vector<8x20xf32>
    %366 = vector.extract_strided_slice %356 {offsets = [0, 40], sizes = [8, 20], strides = [1, 1]} : vector<8x60xf32> to vector<8x20xf32>
    %367 = vector.extract_strided_slice %333 {offsets = [0, 40], sizes = [8, 20], strides = [1, 1]} : vector<8x60xf32> to vector<8x20xf32>
    %368 = vector.broadcast %15 : vector<1x20xf32> to vector<8x20xf32>
    %369 = arith.addf %367, %368 : vector<8x20xf32>
    %370 = arith.mulf %364, %369 : vector<8x20xf32>
    %371 = arith.addf %366, %370 : vector<8x20xf32>
    %372 = math.tanh %371 : vector<8x20xf32>
    %373 = arith.subf %331, %372 : vector<8x20xf32>
    %374 = arith.mulf %365, %373 : vector<8x20xf32>
    %375 = arith.addf %372, %374 : vector<8x20xf32>
    %c0_62 = arith.constant 0 : index
    %c0_63 = arith.constant 0 : index
    %c0_64 = arith.constant 0 : index
    %376 = vector.load %arg4[%c0_62, %c0_63, %c0_64] : memref<2x8x20xf32, #tpu.memory_space<vmem>>, vector<1x8x20xf32>
    %377 = vector.shape_cast %376 : vector<1x8x20xf32> to vector<8x20xf32>
    %378 = vector.shape_cast %353 : vector<8x20xf32> to vector<1x8x20xf32>
    tpu.vector_store %arg4[%c0_62, %c0_63, %c0_64], %378 {strides = array<i32>} : memref<2x8x20xf32, #tpu.memory_space<vmem>>, vector<1x8x20xf32>,
    %c1_65 = arith.constant 1 : index
    %c0_66 = arith.constant 0 : index
    %c0_67 = arith.constant 0 : index
    %379 = vector.load %arg4[%c1_65, %c0_66, %c0_67] : memref<2x8x20xf32, #tpu.memory_space<vmem>>, vector<1x8x20xf32>
    %380 = vector.shape_cast %379 : vector<1x8x20xf32> to vector<8x20xf32>
    %381 = vector.shape_cast %375 : vector<8x20xf32> to vector<1x8x20xf32>
    tpu.vector_store %arg4[%c1_65, %c0_66, %c0_67], %381 {strides = array<i32>} : memref<2x8x20xf32, #tpu.memory_space<vmem>>, vector<1x8x20xf32>,
    return
  }
}

</mosaic_0001>

<llo_original>
// kernel: gru_model_forward.1
$region0: #{gru_model_forward.1}
  #allocation0 [shape = 'u32[]', space=smem, size = 0x4, offset = 0x4, fixed_abs, tag = 'smem constant byte address 0x4 - core index']
  #allocation1 [shape = 'u32[72,128]{1,0:T(1,128)}', space=vmem, size = 0x9000, scoped, tag = 'internal scratch']
  %s0 = inlined_call_operand.vmem [shape: f32[64,20], index: 0, kind: input, shape index: {}]
  %s1 = inlined_call_operand.vmem [shape: f32[2,8,20], index: 1, kind: input, shape index: {}]
  %s2 = inlined_call_operand.vmem [shape: f32[4,20,60], index: 2, kind: input, shape index: {}]
  %s3 = inlined_call_operand.vmem [shape: f32[2,2,60], index: 3, kind: input, shape index: {}]
  %s4 = inlined_call_operand.vmem [shape: f32[2,8,20], index: 4, kind: output, shape index: {}]
  %s5 = sld [smem:[#allocation0]]
  $region26: #{gru_model_forward.1} parent=0
    _
  %s7 = ssub.s32 1, %s5
  %s8 = scalar_select 0, %s7, %s5
  // Predicated region
  $region2: #{gru_model_forward.1} parent=0 // pred_check
    _
  $region3: #{gru_model_forward.1} parent=0 // pred_check_branch
    %10 = sbr.rel (0) target = $region5
  $region4: #{gru_model_forward.1} parent=0 // pred_region
    _
  $region5: #{gru_model_forward.1} parent=0 // pred_fallthru
    _
  // Predicated region
  $region6: #{gru_model_forward.1} parent=0 // pred_check
    _
  $region7: #{gru_model_forward.1} parent=0 // pred_check_branch
    %12 = sbr.rel (0) target = $region9
  $region8: #{gru_model_forward.1} parent=0 // pred_region
    _
  $region9: #{gru_model_forward.1} parent=0 // pred_fallthru
    _
  // Predicated region
  $region10: #{gru_model_forward.1} parent=0 // pred_check
    _
  $region11: #{gru_model_forward.1} parent=0 // pred_check_branch
    %14 = sbr.rel (0) target = $region13
  $region12: #{gru_model_forward.1} parent=0 // pred_region
    _
  $region13: #{gru_model_forward.1} parent=0 // pred_fallthru
    _
  // Predicated region
  $region14: #{gru_model_forward.1} parent=0 // pred_check
    _
  $region15: #{gru_model_forward.1} parent=0 // pred_check_branch
    %16 = sbr.rel (0) target = $region17
  $region16: #{gru_model_forward.1} parent=0 // pred_region
    _
  $region17: #{gru_model_forward.1} parent=0 // pred_fallthru
    _
  %v17 = vld [vmem:[%s2] sm:$0xff]
  %v18 = vld [vmem:[%s2 + $0x8] sm:$0xff]
  %v19 = vld [vmem:[%s2 + $0x10] sm:$0xf]
  %s20 = scalar_lea.vmem %s2, 24
  %v21 = vld [vmem:[%s20] sm:$0xff]
  %v22 = vld [vmem:[%s20 + $0x8] sm:$0xff]
  %v23 = vld [vmem:[%s20 + $0x10] sm:$0xf]
  %s24 = scalar_lea.vmem %s2, 48
  %v25 = vld [vmem:[%s24] sm:$0xff]
  %v26 = vld [vmem:[%s24 + $0x8] sm:$0xff]
  %v27 = vld [vmem:[%s24 + $0x10] sm:$0xf]
  %s28 = scalar_lea.vmem %s2, 72
  %v29 = vld [vmem:[%s28] sm:$0xff]
  %v30 = vld [vmem:[%s28 + $0x8] sm:$0xff]
  %v31 = vld [vmem:[%s28 + $0x10] sm:$0xf]
  %v32 = vld [vmem:[%s3] sm:$0x3]
  %s33 = scalar_lea.vmem %s3, 2
  %v34 = vld [vmem:[%s33] sm:$0x3]
  %v35 = vld [vmem:[%s0] sm:$0xff]
  %v36 = vld [vmem:[%s0 + $0x8] sm:$0xff]
  %v37 = vld [vmem:[%s0 + $0x10] sm:$0xff]
  %v38 = vld [vmem:[%s0 + $0x18] sm:$0xff]
  %v39 = vld [vmem:[%s0 + $0x20] sm:$0xff]
  %v40 = vld [vmem:[%s0 + $0x28] sm:$0xff]
  %v41 = vld [vmem:[%s0 + $0x30] sm:$0xff]
  %v42 = vld [vmem:[%s0 + $0x38] sm:$0xff]
  %v43 = vperm.slane %v32, 0
  %vm44 = vcmask 162816
  %v46 = vsel %vm44, %v35, 0
  %v49 = vsel %vm44, %v36, 0
  %v52 = vsel %vm44, %v37, 0
  %v55 = vsel %vm44, %v38, 0
  %v58 = vsel %vm44, %v39, 0
  %v61 = vsel %vm44, %v40, 0
  %v64 = vsel %vm44, %v41, 0
  %v67 = vsel %vm44, %v42, 0
  %vm69 = vcmask 1043456
  %v71 = vsel %vm69, %v19, 0
  %73 = vmatpush.msra.mxu0 0.0
  %74 = vmatpush.msra.mxu0 0.0
  %75 = vmatpush.msra.mxu0 0.0
  %76 = vmatpush.msra.mxu0 0.0
  %77 = vmatpush.msra.mxu0 0.0
  %78 = vmatpush.msra.mxu0 0.0
  %79 = vmatpush.msra.mxu0 0.0
  %80 = vmatpush.msra.mxu0 0.0
  %81 = vmatpush.msra.mxu0 0.0
  %82 = vmatpush.msra.mxu0 0.0
  %83 = vmatpush.msra.mxu0 0.0
  %84 = vmatpush.msra.mxu0 0.0
  %85 = vmatpush.msra.mxu0 0.0
  %86 = vmatpush.msra.mxu0 %v71
  %87 = vmatpush.msra.mxu0 %v18
  %88 = vmatpush.msra.mxu0 %v17
  %89 = vmatmul.f32.gmra.mxu0 %v46
  %v90 = vpop.f32.mrf.mxu0
  %v91 = vadd.f32 %v43, %v90
  %92 = vmatmul.f32.gmra.mxu0 %v49
  %v93 = vpop.f32.mrf.mxu0
  %v94 = vadd.f32 %v43, %v93
  %95 = vmatmul.f32.gmra.mxu0 %v52
  %v96 = vpop.f32.mrf.mxu0
  %v97 = vadd.f32 %v43, %v96
  %98 = vmatmul.f32.gmra.mxu0 %v55
  %v99 = vpop.f32.mrf.mxu0
  %v100 = vadd.f32 %v43, %v99
  %101 = vmatmul.f32.gmra.mxu0 %v58
  %v102 = vpop.f32.mrf.mxu0
  %v103 = vadd.f32 %v43, %v102
  %104 = vmatmul.f32.gmra.mxu0 %v61
  %v105 = vpop.f32.mrf.mxu0
  %v106 = vadd.f32 %v43, %v105
  %107 = vmatmul.f32.gmra.mxu0 %v64
  %v108 = vpop.f32.mrf.mxu0
  %v109 = vadd.f32 %v43, %v108
  %110 = vmatmul.f32.gmra.mxu0 %v67
  %v111 = vpop.f32.mrf.mxu0
  %v112 = vadd.f32 %v43, %v111
  %113 = vdwg.mxu0
  %v114 = vld [vmem:[%s1] sm:$0xff]
  %s115 = scalar_lea.vmem %s1, 8
  %v116 = vld [vmem:[%s115] sm:$0xff]
  %v118 = vsel %vm44, %v116, 0
  %v121 = vsel %vm69, %v31, 0
  %123 = vmatpush.msra.mxu0 0.0
  %124 = vmatpush.msra.mxu0 0.0
  %125 = vmatpush.msra.mxu0 0.0
  %126 = vmatpush.msra.mxu0 0.0
  %127 = vmatpush.msra.mxu0 0.0
  %128 = vmatpush.msra.mxu0 0.0
  %129 = vmatpush.msra.mxu0 0.0
  %130 = vmatpush.msra.mxu0 0.0
  %131 = vmatpush.msra.mxu0 0.0
  %132 = vmatpush.msra.mxu0 0.0
  %133 = vmatpush.msra.mxu0 0.0
  %134 = vmatpush.msra.mxu0 0.0
  %135 = vmatpush.msra.mxu0 0.0
  %136 = vmatpush.msra.mxu0 %v121
  %137 = vmatpush.msra.mxu0 %v30
  %138 = vmatpush.msra.mxu0 %v29
  %139 = vmatmul.f32.gmra.mxu0 %v118
  %v140 = vpop.f32.mrf.mxu0
  %v141 = vadd.f32 0.0, %v140
  %142 = vdwg.mxu0
  %v144 = vsel %vm44, %v114, 0
  %v147 = vsel %vm69, %v23, 0
  %149 = vmatpush.msra.mxu0 0.0
  %150 = vmatpush.msra.mxu0 0.0
  %151 = vmatpush.msra.mxu0 0.0
  %152 = vmatpush.msra.mxu0 0.0
  %153 = vmatpush.msra.mxu0 0.0
  %154 = vmatpush.msra.mxu0 0.0
  %155 = vmatpush.msra.mxu0 0.0
  %156 = vmatpush.msra.mxu0 0.0
  %157 = vmatpush.msra.mxu0 0.0
  %158 = vmatpush.msra.mxu0 0.0
  %159 = vmatpush.msra.mxu0 0.0
  %160 = vmatpush.msra.mxu0 0.0
  %161 = vmatpush.msra.mxu0 0.0
  %162 = vmatpush.msra.mxu0 %v147
  %163 = vmatpush.msra.mxu0 %v22
  %164 = vmatpush.msra.mxu0 %v21
  %165 = vmatmul.f32.gmra.mxu0 %v144
  %v166 = vpop.f32.mrf.mxu0
  %v167 = vadd.f32 0.0, %v166
  %168 = vdwg.mxu0
  %v169 = vadd.f32 %v91, %v167
  %v170 = vxor.u32 %v169, 2147483648
  %v171 = vmul.f32 %v170, 1.442695
  %v172 = vpow.pop %v171
  %v173 = vadd.f32 %v172, 1.0
  %v174 = vrcp.pop %v173
  %v175 = vmul.f32 %v173, %v174
  %v176 = vsub.f32 1.0, %v175
  %v177 = vmul.f32 %v174, %v176
  %v178 = vadd.f32 %v174, %v177
  %vm179 = vweird.f32 %v173
  %vm180 = vweird.f32 %v174
  %vm181 = vmor %vm179, %vm180
  %v182 = vsel %vm181, %v174, %v178
  %v183 = vand.u32 2147483647, %v173
  %vm184 = vcmp.eq.f32.partialorder %v183, 8.507059e+37
  %v185 = vand.u32 %v173, 2147483648
  %v186 = vor.u32 1.1754944e-38, %v185
  %v187 = vsel %vm184, %v186, %v182
  %v188 = vmul.f32 1.0, %v187
  %v189 = vperm.slane %v32, 1
  %191 = vrot.lane.b32.xlu0 %v189, 40
  %v192 = vpop.permute.xlu0 %191
  %v194 = vadd.f32 %v167, %v192
  %196 = vrot.lane.b32.xlu0 %v194, 88
  %v197 = vpop.permute.xlu0 %196
  %v199 = vmul.f32 %v188, %v197
  %201 = vrot.lane.b32.xlu0 %v199, 40
  %v202 = vpop.permute.xlu0 %201
  %v204 = vadd.f32 %v91, %v202
  %v205 = vtanh.pop %v204
  %207 = vrot.lane.b32.xlu0 %v205, 88
  %v208 = vpop.permute.xlu0 %207
  %v210 = vsub.f32 %v114, %v208
  %212 = vrot.lane.b32.xlu0 %v210, 20
  %v213 = vpop.permute.xlu0 %212
  %v215 = vmul.f32 %v188, %v213
  %217 = vrot.lane.b32.xlu0 %v215, 20
  %v218 = vpop.permute.xlu0 %217
  %v220 = vadd.f32 %v205, %v218
  %v221 = vperm.slane %v34, 0
  %223 = vrot.lane.b32.xlu0 %v220, 88
  %v224 = vpop.permute.xlu0 %223
  %v225 = vsel %vm44, %v224, 0
  %v228 = vsel %vm69, %v27, 0
  %230 = vmatpush.msra.mxu0 0.0
  %231 = vmatpush.msra.mxu0 0.0
  %232 = vmatpush.msra.mxu0 0.0
  %233 = vmatpush.msra.mxu0 0.0
  %234 = vmatpush.msra.mxu0 0.0
  %235 = vmatpush.msra.mxu0 0.0
  %236 = vmatpush.msra.mxu0 0.0
  %237 = vmatpush.msra.mxu0 0.0
  %238 = vmatpush.msra.mxu0 0.0
  %239 = vmatpush.msra.mxu0 0.0
  %240 = vmatpush.msra.mxu0 0.0
  %241 = vmatpush.msra.mxu0 0.0
  %242 = vmatpush.msra.mxu0 0.0
  %243 = vmatpush.msra.mxu0 %v228
  %244 = vmatpush.msra.mxu0 %v26
  %245 = vmatpush.msra.mxu0 %v25
  %246 = vmatmul.f32.gmra.mxu0 %v225
  %v247 = vpop.f32.mrf.mxu0
  %v248 = vadd.f32 %v221, %v247
  %249 = vdwg.mxu0
  %v250 = vadd.f32 %v248, %v141
  %v251 = vxor.u32 %v250, 2147483648
  %v252 = vmul.f32 %v251, 1.442695
  %v253 = vpow.pop %v252
  %v254 = vadd.f32 %v253, 1.0
  %v255 = vrcp.pop %v254
  %v256 = vmul.f32 %v254, %v255
  %v257 = vsub.f32 1.0, %v256
  %v258 = vmul.f32 %v255, %v257
  %v259 = vadd.f32 %v255, %v258
  %vm260 = vweird.f32 %v254
  %vm261 = vweird.f32 %v255
  %vm262 = vmor %vm260, %vm261
  %v263 = vsel %vm262, %v255, %v259
  %v264 = vand.u32 2147483647, %v254
  %vm265 = vcmp.eq.f32.partialorder %v264, 8.507059e+37
  %v266 = vand.u32 %v254, 2147483648
  %v267 = vor.u32 1.1754944e-38, %v266
  %v268 = vsel %vm265, %v267, %v263
  %v269 = vmul.f32 1.0, %v268
  %v270 = vperm.slane %v34, 1
  %272 = vrot.lane.b32.xlu0 %v270, 40
  %v273 = vpop.permute.xlu0 %272
  %v275 = vadd.f32 %v141, %v273
  %277 = vrot.lane.b32.xlu0 %v275, 88
  %v278 = vpop.permute.xlu0 %277
  %v280 = vmul.f32 %v269, %v278
  %282 = vrot.lane.b32.xlu0 %v280, 40
  %v283 = vpop.permute.xlu0 %282
  %v285 = vadd.f32 %v248, %v283
  %v286 = vtanh.pop %v285
  %288 = vrot.lane.b32.xlu0 %v286, 88
  %v289 = vpop.permute.xlu0 %288
  %v291 = vsub.f32 %v116, %v289
  %293 = vrot.lane.b32.xlu0 %v291, 20
  %v294 = vpop.permute.xlu0 %293
  %v296 = vmul.f32 %v269, %v294
  %298 = vrot.lane.b32.xlu0 %v296, 20
  %v299 = vpop.permute.xlu0 %298
  %v301 = vadd.f32 %v286, %v299
  %303 = vrot.lane.b32.xlu0 %v301, 88
  %v304 = vpop.permute.xlu0 %303
  %v305 = vsel %vm44, %v304, 0
  %307 = vmatpush.msra.mxu0 0.0
  %308 = vmatpush.msra.mxu0 0.0
  %309 = vmatpush.msra.mxu0 0.0
  %310 = vmatpush.msra.mxu0 0.0
  %311 = vmatpush.msra.mxu0 0.0
  %312 = vmatpush.msra.mxu0 0.0
  %313 = vmatpush.msra.mxu0 0.0
  %314 = vmatpush.msra.mxu0 0.0
  %315 = vmatpush.msra.mxu0 0.0
  %316 = vmatpush.msra.mxu0 0.0
  %317 = vmatpush.msra.mxu0 0.0
  %318 = vmatpush.msra.mxu0 0.0
  %319 = vmatpush.msra.mxu0 0.0
  %320 = vmatpush.msra.mxu0 %v121
  %321 = vmatpush.msra.mxu0 %v30
  %322 = vmatpush.msra.mxu0 %v29
  %323 = vmatmul.f32.gmra.mxu0 %v305
  %v324 = vpop.f32.mrf.mxu0
  %v325 = vadd.f32 0.0, %v324
  %326 = vdwg.mxu0
  %327 = vmatpush.msra.mxu0 0.0
  %328 = vmatpush.msra.mxu0 0.0
  %329 = vmatpush.msra.mxu0 0.0
  %330 = vmatpush.msra.mxu0 0.0
  %331 = vmatpush.msra.mxu0 0.0
  %332 = vmatpush.msra.mxu0 0.0
  %333 = vmatpush.msra.mxu0 0.0
  %334 = vmatpush.msra.mxu0 0.0
  %335 = vmatpush.msra.mxu0 0.0
  %336 = vmatpush.msra.mxu0 0.0
  %337 = vmatpush.msra.mxu0 0.0
  %338 = vmatpush.msra.mxu0 0.0
  %339 = vmatpush.msra.mxu0 0.0
  %340 = vmatpush.msra.mxu0 %v147
  %341 = vmatpush.msra.mxu0 %v22
  %342 = vmatpush.msra.mxu0 %v21
  %343 = vmatmul.f32.gmra.mxu0 %v225
  %v344 = vpop.f32.mrf.mxu0
  %v345 = vadd.f32 0.0, %v344
  %346 = vdwg.mxu0
  %v347 = vadd.f32 %v94, %v345
  %v348 = vxor.u32 %v347, 2147483648
  %v349 = vmul.f32 %v348, 1.442695
  %v350 = vpow.pop %v349
  %v351 = vadd.f32 %v350, 1.0
  %v352 = vrcp.pop %v351
  %v353 = vmul.f32 %v351, %v352
  %v354 = vsub.f32 1.0, %v353
  %v355 = vmul.f32 %v352, %v354
  %v356 = vadd.f32 %v352, %v355
  %vm357 = vweird.f32 %v351
  %vm358 = vweird.f32 %v352
  %vm359 = vmor %vm357, %vm358
  %v360 = vsel %vm359, %v352, %v356
  %v361 = vand.u32 2147483647, %v351
  %vm362 = vcmp.eq.f32.partialorder %v361, 8.507059e+37
  %v363 = vand.u32 %v351, 2147483648
  %v364 = vor.u32 1.1754944e-38, %v363
  %v365 = vsel %vm362, %v364, %v360
  %v366 = vmul.f32 1.0, %v365
  %v367 = vadd.f32 %v345, %v192
  %369 = vrot.lane.b32.xlu0 %v367, 88
  %v370 = vpop.permute.xlu0 %369
  %v372 = vmul.f32 %v366, %v370
  %374 = vrot.lane.b32.xlu0 %v372, 40
  %v375 = vpop.permute.xlu0 %374
  %v377 = vadd.f32 %v94, %v375
  %v378 = vtanh.pop %v377
  %v379 = vsub.f32 %v220, %v378
  %381 = vrot.lane.b32.xlu0 %v379, 108
  %v382 = vpop.permute.xlu0 %381
  %v384 = vmul.f32 %v366, %v382
  %386 = vrot.lane.b32.xlu0 %v384, 20
  %v387 = vpop.permute.xlu0 %386
  %v389 = vadd.f32 %v378, %v387
  %391 = vrot.lane.b32.xlu0 %v389, 88
  %v392 = vpop.permute.xlu0 %391
  %v393 = vsel %vm44, %v392, 0
  %395 = vmatpush.msra.mxu0 0.0
  %396 = vmatpush.msra.mxu0 0.0
  %397 = vmatpush.msra.mxu0 0.0
  %398 = vmatpush.msra.mxu0 0.0
  %399 = vmatpush.msra.mxu0 0.0
  %400 = vmatpush.msra.mxu0 0.0
  %401 = vmatpush.msra.mxu0 0.0
  %402 = vmatpush.msra.mxu0 0.0
  %403 = vmatpush.msra.mxu0 0.0
  %404 = vmatpush.msra.mxu0 0.0
  %405 = vmatpush.msra.mxu0 0.0
  %406 = vmatpush.msra.mxu0 0.0
  %407 = vmatpush.msra.mxu0 0.0
  %408 = vmatpush.msra.mxu0 %v228
  %409 = vmatpush.msra.mxu0 %v26
  %410 = vmatpush.msra.mxu0 %v25
  %411 = vmatmul.f32.gmra.mxu0 %v393
  %v412 = vpop.f32.mrf.mxu0
  %v413 = vadd.f32 %v221, %v412
  %414 = vdwg.mxu0
  %v415 = vadd.f32 %v413, %v325
  %v416 = vxor.u32 %v415, 2147483648
  %v417 = vmul.f32 %v416, 1.442695
  %v418 = vpow.pop %v417
  %v419 = vadd.f32 %v418, 1.0
  %v420 = vrcp.pop %v419
  %v421 = vmul.f32 %v419, %v420
  %v422 = vsub.f32 1.0, %v421
  %v423 = vmul.f32 %v420, %v422
  %v424 = vadd.f32 %v420, %v423
  %vm425 = vweird.f32 %v419
  %vm426 = vweird.f32 %v420
  %vm427 = vmor %vm425, %vm426
  %v428 = vsel %vm427, %v420, %v424
  %v429 = vand.u32 2147483647, %v419
  %vm430 = vcmp.eq.f32.partialorder %v429, 8.507059e+37
  %v431 = vand.u32 %v419, 2147483648
  %v432 = vor.u32 1.1754944e-38, %v431
  %v433 = vsel %vm430, %v432, %v428
  %v434 = vmul.f32 1.0, %v433
  %v435 = vadd.f32 %v325, %v273
  %437 = vrot.lane.b32.xlu0 %v435, 88
  %v438 = vpop.permute.xlu0 %437
  %v440 = vmul.f32 %v434, %v438
  %442 = vrot.lane.b32.xlu0 %v440, 40
  %v443 = vpop.permute.xlu0 %442
  %v445 = vadd.f32 %v413, %v443
  %v446 = vtanh.pop %v445
  %v447 = vsub.f32 %v301, %v446
  %449 = vrot.lane.b32.xlu0 %v447, 108
  %v450 = vpop.permute.xlu0 %449
  %v452 = vmul.f32 %v434, %v450
  %454 = vrot.lane.b32.xlu0 %v452, 20
  %v455 = vpop.permute.xlu0 %454
  %v457 = vadd.f32 %v446, %v455
  %459 = vrot.lane.b32.xlu0 %v457, 88
  %v460 = vpop.permute.xlu0 %459
  %v461 = vsel %vm44, %v460, 0
  %463 = vmatpush.msra.mxu0 0.0
  %464 = vmatpush.msra.mxu0 0.0
  %465 = vmatpush.msra.mxu0 0.0
  %466 = vmatpush.msra.mxu0 0.0
  %467 = vmatpush.msra.mxu0 0.0
  %468 = vmatpush.msra.mxu0 0.0
  %469 = vmatpush.msra.mxu0 0.0
  %470 = vmatpush.msra.mxu0 0.0
  %471 = vmatpush.msra.mxu0 0.0
  %472 = vmatpush.msra.mxu0 0.0
  %473 = vmatpush.msra.mxu0 0.0
  %474 = vmatpush.msra.mxu0 0.0
  %475 = vmatpush.msra.mxu0 0.0
  %476 = vmatpush.msra.mxu0 %v121
  %477 = vmatpush.msra.mxu0 %v30
  %478 = vmatpush.msra.mxu0 %v29
  %479 = vmatmul.f32.gmra.mxu0 %v461
  %v480 = vpop.f32.mrf.mxu0
  %v481 = vadd.f32 0.0, %v480
  %482 = vdwg.mxu0
  %483 = vmatpush.msra.mxu0 0.0
  %484 = vmatpush.msra.mxu0 0.0
  %485 = vmatpush.msra.mxu0 0.0
  %486 = vmatpush.msra.mxu0 0.0
  %487 = vmatpush.msra.mxu0 0.0
  %488 = vmatpush.msra.mxu0 0.0
  %489 = vmatpush.msra.mxu0 0.0
  %490 = vmatpush.msra.mxu0 0.0
  %491 = vmatpush.msra.mxu0 0.0
  %492 = vmatpush.msra.mxu0 0.0
  %493 = vmatpush.msra.mxu0 0.0
  %494 = vmatpush.msra.mxu0 0.0
  %495 = vmatpush.msra.mxu0 0.0
  %496 = vmatpush.msra.mxu0 %v147
  %497 = vmatpush.msra.mxu0 %v22
  %498 = vmatpush.msra.mxu0 %v21
  %499 = vmatmul.f32.gmra.mxu0 %v393
  %v500 = vpop.f32.mrf.mxu0
  %v501 = vadd.f32 0.0, %v500
  %502 = vdwg.mxu0
  %v503 = vadd.f32 %v97, %v501
  %v504 = vxor.u32 %v503, 2147483648
  %v505 = vmul.f32 %v504, 1.442695
  %v506 = vpow.pop %v505
  %v507 = vadd.f32 %v506, 1.0
  %v508 = vrcp.pop %v507
  %v509 = vmul.f32 %v507, %v508
  %v510 = vsub.f32 1.0, %v509
  %v511 = vmul.f32 %v508, %v510
  %v512 = vadd.f32 %v508, %v511
  %vm513 = vweird.f32 %v507
  %vm514 = vweird.f32 %v508
  %vm515 = vmor %vm513, %vm514
  %v516 = vsel %vm515, %v508, %v512
  %v517 = vand.u32 2147483647, %v507
  %vm518 = vcmp.eq.f32.partialorder %v517, 8.507059e+37
  %v519 = vand.u32 %v507, 2147483648
  %v520 = vor.u32 1.1754944e-38, %v519
  %v521 = vsel %vm518, %v520, %v516
  %v522 = vmul.f32 1.0, %v521
  %v523 = vadd.f32 %v501, %v192
  %525 = vrot.lane.b32.xlu0 %v523, 88
  %v526 = vpop.permute.xlu0 %525
  %v528 = vmul.f32 %v522, %v526
  %530 = vrot.lane.b32.xlu0 %v528, 40
  %v531 = vpop.permute.xlu0 %530
  %v533 = vadd.f32 %v97, %v531
  %v534 = vtanh.pop %v533
  %v535 = vsub.f32 %v389, %v534
  %537 = vrot.lane.b32.xlu0 %v535, 108
  %v538 = vpop.permute.xlu0 %537
  %v540 = vmul.f32 %v522, %v538
  %542 = vrot.lane.b32.xlu0 %v540, 20
  %v543 = vpop.permute.xlu0 %542
  %v545 = vadd.f32 %v534, %v543
  %547 = vrot.lane.b32.xlu0 %v545, 88
  %v548 = vpop.permute.xlu0 %547
  %v549 = vsel %vm44, %v548, 0
  %551 = vmatpush.msra.mxu0 0.0
  %552 = vmatpush.msra.mxu0 0.0
  %553 = vmatpush.msra.mxu0 0.0
  %554 = vmatpush.msra.mxu0 0.0
  %555 = vmatpush.msra.mxu0 0.0
  %556 = vmatpush.msra.mxu0 0.0
  %557 = vmatpush.msra.mxu0 0.0
  %558 = vmatpush.msra.mxu0 0.0
  %559 = vmatpush.msra.mxu0 0.0
  %560 = vmatpush.msra.mxu0 0.0
  %561 = vmatpush.msra.mxu0 0.0
  %562 = vmatpush.msra.mxu0 0.0
  %563 = vmatpush.msra.mxu0 0.0
  %564 = vmatpush.msra.mxu0 %v228
  %565 = vmatpush.msra.mxu0 %v26
  %566 = vmatpush.msra.mxu0 %v25
  %567 = vmatmul.f32.gmra.mxu0 %v549
  %v568 = vpop.f32.mrf.mxu0
  %v569 = vadd.f32 %v221, %v568
  %570 = vdwg.mxu0
  %v571 = vadd.f32 %v569, %v481
  %v572 = vxor.u32 %v571, 2147483648
  %v573 = vmul.f32 %v572, 1.442695
  %v574 = vpow.pop %v573
  %v575 = vadd.f32 %v574, 1.0
  %v576 = vrcp.pop %v575
  %v577 = vmul.f32 %v575, %v576
  %v578 = vsub.f32 1.0, %v577
  %v579 = vmul.f32 %v576, %v578
  %v580 = vadd.f32 %v576, %v579
  %vm581 = vweird.f32 %v575
  %vm582 = vweird.f32 %v576
  %vm583 = vmor %vm581, %vm582
  %v584 = vsel %vm583, %v576, %v580
  %v585 = vand.u32 2147483647, %v575
  %vm586 = vcmp.eq.f32.partialorder %v585, 8.507059e+37
  %v587 = vand.u32 %v575, 2147483648
  %v588 = vor.u32 1.1754944e-38, %v587
  %v589 = vsel %vm586, %v588, %v584
  %v590 = vmul.f32 1.0, %v589
  %v591 = vadd.f32 %v481, %v273
  %593 = vrot.lane.b32.xlu0 %v591, 88
  %v594 = vpop.permute.xlu0 %593
  %v596 = vmul.f32 %v590, %v594
  %598 = vrot.lane.b32.xlu0 %v596, 40
  %v599 = vpop.permute.xlu0 %598
  %v601 = vadd.f32 %v569, %v599
  %v602 = vtanh.pop %v601
  %v603 = vsub.f32 %v457, %v602
  %605 = vrot.lane.b32.xlu0 %v603, 108
  %v606 = vpop.permute.xlu0 %605
  %v608 = vmul.f32 %v590, %v606
  %610 = vrot.lane.b32.xlu0 %v608, 20
  %v611 = vpop.permute.xlu0 %610
  %v613 = vadd.f32 %v602, %v611
  %615 = vrot.lane.b32.xlu0 %v613, 88
  %v616 = vpop.permute.xlu0 %615
  %v617 = vsel %vm44, %v616, 0
  %619 = vmatpush.msra.mxu0 0.0
  %620 = vmatpush.msra.mxu0 0.0
  %621 = vmatpush.msra.mxu0 0.0
  %622 = vmatpush.msra.mxu0 0.0
  %623 = vmatpush.msra.mxu0 0.0
  %624 = vmatpush.msra.mxu0 0.0
  %625 = vmatpush.msra.mxu0 0.0
  %626 = vmatpush.msra.mxu0 0.0
  %627 = vmatpush.msra.mxu0 0.0
  %628 = vmatpush.msra.mxu0 0.0
  %629 = vmatpush.msra.mxu0 0.0
  %630 = vmatpush.msra.mxu0 0.0
  %631 = vmatpush.msra.mxu0 0.0
  %632 = vmatpush.msra.mxu0 %v121
  %633 = vmatpush.msra.mxu0 %v30
  %634 = vmatpush.msra.mxu0 %v29
  %635 = vmatmul.f32.gmra.mxu0 %v617
  %v636 = vpop.f32.mrf.mxu0
  %v637 = vadd.f32 0.0, %v636
  %638 = vdwg.mxu0
  %639 = vmatpush.msra.mxu0 0.0
  %640 = vmatpush.msra.mxu0 0.0
  %641 = vmatpush.msra.mxu0 0.0
  %642 = vmatpush.msra.mxu0 0.0
  %643 = vmatpush.msra.mxu0 0.0
  %644 = vmatpush.msra.mxu0 0.0
  %645 = vmatpush.msra.mxu0 0.0
  %646 = vmatpush.msra.mxu0 0.0
  %647 = vmatpush.msra.mxu0 0.0
  %648 = vmatpush.msra.mxu0 0.0
  %649 = vmatpush.msra.mxu0 0.0
  %650 = vmatpush.msra.mxu0 0.0
  %651 = vmatpush.msra.mxu0 0.0
  %652 = vmatpush.msra.mxu0 %v147
  %653 = vmatpush.msra.mxu0 %v22
  %654 = vmatpush.msra.mxu0 %v21
  %655 = vmatmul.f32.gmra.mxu0 %v549
  %v656 = vpop.f32.mrf.mxu0
  %v657 = vadd.f32 0.0, %v656
  %658 = vdwg.mxu0
  %v659 = vadd.f32 %v100, %v657
  %v660 = vxor.u32 %v659, 2147483648
  %v661 = vmul.f32 %v660, 1.442695
  %v662 = vpow.pop %v661
  %v663 = vadd.f32 %v662, 1.0
  %v664 = vrcp.pop %v663
  %v665 = vmul.f32 %v663, %v664
  %v666 = vsub.f32 1.0, %v665
  %v667 = vmul.f32 %v664, %v666
  %v668 = vadd.f32 %v664, %v667
  %vm669 = vweird.f32 %v663
  %vm670 = vweird.f32 %v664
  %vm671 = vmor %vm669, %vm670
  %v672 = vsel %vm671, %v664, %v668
  %v673 = vand.u32 2147483647, %v663
  %vm674 = vcmp.eq.f32.partialorder %v673, 8.507059e+37
  %v675 = vand.u32 %v663, 2147483648
  %v676 = vor.u32 1.1754944e-38, %v675
  %v677 = vsel %vm674, %v676, %v672
  %v678 = vmul.f32 1.0, %v677
  %v679 = vadd.f32 %v657, %v192
  %681 = vrot.lane.b32.xlu0 %v679, 88
  %v682 = vpop.permute.xlu0 %681
  %v684 = vmul.f32 %v678, %v682
  %686 = vrot.lane.b32.xlu0 %v684, 40
  %v687 = vpop.permute.xlu0 %686
  %v689 = vadd.f32 %v100, %v687
  %v690 = vtanh.pop %v689
  %v691 = vsub.f32 %v545, %v690
  %693 = vrot.lane.b32.xlu0 %v691, 108
  %v694 = vpop.permute.xlu0 %693
  %v696 = vmul.f32 %v678, %v694
  %698 = vrot.lane.b32.xlu0 %v696, 20
  %v699 = vpop.permute.xlu0 %698
  %v701 = vadd.f32 %v690, %v699
  %703 = vrot.lane.b32.xlu0 %v701, 88
  %v704 = vpop.permute.xlu0 %703
  %v705 = vsel %vm44, %v704, 0
  %707 = vmatpush.msra.mxu0 0.0
  %708 = vmatpush.msra.mxu0 0.0
  %709 = vmatpush.msra.mxu0 0.0
  %710 = vmatpush.msra.mxu0 0.0
  %711 = vmatpush.msra.mxu0 0.0
  %712 = vmatpush.msra.mxu0 0.0
  %713 = vmatpush.msra.mxu0 0.0
  %714 = vmatpush.msra.mxu0 0.0
  %715 = vmatpush.msra.mxu0 0.0
  %716 = vmatpush.msra.mxu0 0.0
  %717 = vmatpush.msra.mxu0 0.0
  %718 = vmatpush.msra.mxu0 0.0
  %719 = vmatpush.msra.mxu0 0.0
  %720 = vmatpush.msra.mxu0 %v228
  %721 = vmatpush.msra.mxu0 %v26
  %722 = vmatpush.msra.mxu0 %v25
  %723 = vmatmul.f32.gmra.mxu0 %v705
  %v724 = vpop.f32.mrf.mxu0
  %v725 = vadd.f32 %v221, %v724
  %726 = vdwg.mxu0
  %v727 = vadd.f32 %v725, %v637
  %v728 = vxor.u32 %v727, 2147483648
  %v729 = vmul.f32 %v728, 1.442695
  %v730 = vpow.pop %v729
  %v731 = vadd.f32 %v730, 1.0
  %v732 = vrcp.pop %v731
  %v733 = vmul.f32 %v731, %v732
  %v734 = vsub.f32 1.0, %v733
  %v735 = vmul.f32 %v732, %v734
  %v736 = vadd.f32 %v732, %v735
  %vm737 = vweird.f32 %v731
  %vm738 = vweird.f32 %v732
  %vm739 = vmor %vm737, %vm738
  %v740 = vsel %vm739, %v732, %v736
  %v741 = vand.u32 2147483647, %v731
  %vm742 = vcmp.eq.f32.partialorder %v741, 8.507059e+37
  %v743 = vand.u32 %v731, 2147483648
  %v744 = vor.u32 1.1754944e-38, %v743
  %v745 = vsel %vm742, %v744, %v740
  %v746 = vmul.f32 1.0, %v745
  %v747 = vadd.f32 %v637, %v273
  %749 = vrot.lane.b32.xlu0 %v747, 88
  %v750 = vpop.permute.xlu0 %749
  %v752 = vmul.f32 %v746, %v750
  %754 = vrot.lane.b32.xlu0 %v752, 40
  %v755 = vpop.permute.xlu0 %754
  %v757 = vadd.f32 %v725, %v755
  %v758 = vtanh.pop %v757
  %v759 = vsub.f32 %v613, %v758
  %761 = vrot.lane.b32.xlu0 %v759, 108
  %v762 = vpop.permute.xlu0 %761
  %v764 = vmul.f32 %v746, %v762
  %766 = vrot.lane.b32.xlu0 %v764, 20
  %v767 = vpop.permute.xlu0 %766
  %v769 = vadd.f32 %v758, %v767
  %771 = vrot.lane.b32.xlu0 %v769, 88
  %v772 = vpop.permute.xlu0 %771
  %v773 = vsel %vm44, %v772, 0
  %775 = vmatpush.msra.mxu0 0.0
  %776 = vmatpush.msra.mxu0 0.0
  %777 = vmatpush.msra.mxu0 0.0
  %778 = vmatpush.msra.mxu0 0.0
  %779 = vmatpush.msra.mxu0 0.0
  %780 = vmatpush.msra.mxu0 0.0
  %781 = vmatpush.msra.mxu0 0.0
  %782 = vmatpush.msra.mxu0 0.0
  %783 = vmatpush.msra.mxu0 0.0
  %784 = vmatpush.msra.mxu0 0.0
  %785 = vmatpush.msra.mxu0 0.0
  %786 = vmatpush.msra.mxu0 0.0
  %787 = vmatpush.msra.mxu0 0.0
  %788 = vmatpush.msra.mxu0 %v121
  %789 = vmatpush.msra.mxu0 %v30
  %790 = vmatpush.msra.mxu0 %v29
  %791 = vmatmul.f32.gmra.mxu0 %v773
  %v792 = vpop.f32.mrf.mxu0
  %v793 = vadd.f32 0.0, %v792
  %794 = vdwg.mxu0
  %795 = vmatpush.msra.mxu0 0.0
  %796 = vmatpush.msra.mxu0 0.0
  %797 = vmatpush.msra.mxu0 0.0
  %798 = vmatpush.msra.mxu0 0.0
  %799 = vmatpush.msra.mxu0 0.0
  %800 = vmatpush.msra.mxu0 0.0
  %801 = vmatpush.msra.mxu0 0.0
  %802 = vmatpush.msra.mxu0 0.0
  %803 = vmatpush.msra.mxu0 0.0
  %804 = vmatpush.msra.mxu0 0.0
  %805 = vmatpush.msra.mxu0 0.0
  %806 = vmatpush.msra.mxu0 0.0
  %807 = vmatpush.msra.mxu0 0.0
  %808 = vmatpush.msra.mxu0 %v147
  %809 = vmatpush.msra.mxu0 %v22
  %810 = vmatpush.msra.mxu0 %v21
  %811 = vmatmul.f32.gmra.mxu0 %v705
  %v812 = vpop.f32.mrf.mxu0
  %v813 = vadd.f32 0.0, %v812
  %814 = vdwg.mxu0
  %v815 = vadd.f32 %v103, %v813
  %v816 = vxor.u32 %v815, 2147483648
  %v817 = vmul.f32 %v816, 1.442695
  %v818 = vpow.pop %v817
  %v819 = vadd.f32 %v818, 1.0
  %v820 = vrcp.pop %v819
  %v821 = vmul.f32 %v819, %v820
  %v822 = vsub.f32 1.0, %v821
  %v823 = vmul.f32 %v820, %v822
  %v824 = vadd.f32 %v820, %v823
  %vm825 = vweird.f32 %v819
  %vm826 = vweird.f32 %v820
  %vm827 = vmor %vm825, %vm826
  %v828 = vsel %vm827, %v820, %v824
  %v829 = vand.u32 2147483647, %v819
  %vm830 = vcmp.eq.f32.partialorder %v829, 8.507059e+37
  %v831 = vand.u32 %v819, 2147483648
  %v832 = vor.u32 1.1754944e-38, %v831
  %v833 = vsel %vm830, %v832, %v828
  %v834 = vmul.f32 1.0, %v833
  %v835 = vadd.f32 %v813, %v192
  %837 = vrot.lane.b32.xlu0 %v835, 88
  %v838 = vpop.permute.xlu0 %837
  %v840 = vmul.f32 %v834, %v838
  %842 = vrot.lane.b32.xlu0 %v840, 40
  %v843 = vpop.permute.xlu0 %842
  %v845 = vadd.f32 %v103, %v843
  %v846 = vtanh.pop %v845
  %v847 = vsub.f32 %v701, %v846
  %849 = vrot.lane.b32.xlu0 %v847, 108
  %v850 = vpop.permute.xlu0 %849
  %v852 = vmul.f32 %v834, %v850
  %854 = vrot.lane.b32.xlu0 %v852, 20
  %v855 = vpop.permute.xlu0 %854
  %v857 = vadd.f32 %v846, %v855
  %859 = vrot.lane.b32.xlu0 %v857, 88
  %v860 = vpop.permute.xlu0 %859
  %v861 = vsel %vm44, %v860, 0
  %863 = vmatpush.msra.mxu0 0.0
  %864 = vmatpush.msra.mxu0 0.0
  %865 = vmatpush.msra.mxu0 0.0
  %866 = vmatpush.msra.mxu0 0.0
  %867 = vmatpush.msra.mxu0 0.0
  %868 = vmatpush.msra.mxu0 0.0
  %869 = vmatpush.msra.mxu0 0.0
  %870 = vmatpush.msra.mxu0 0.0
  %871 = vmatpush.msra.mxu0 0.0
  %872 = vmatpush.msra.mxu0 0.0
  %873 = vmatpush.msra.mxu0 0.0
  %874 = vmatpush.msra.mxu0 0.0
  %875 = vmatpush.msra.mxu0 0.0
  %876 = vmatpush.msra.mxu0 %v228
  %877 = vmatpush.msra.mxu0 %v26
  %878 = vmatpush.msra.mxu0 %v25
  %879 = vmatmul.f32.gmra.mxu0 %v861
  %v880 = vpop.f32.mrf.mxu0
  %v881 = vadd.f32 %v221, %v880
  %882 = vdwg.mxu0
  %v883 = vadd.f32 %v881, %v793
  %v884 = vxor.u32 %v883, 2147483648
  %v885 = vmul.f32 %v884, 1.442695
  %v886 = vpow.pop %v885
  %v887 = vadd.f32 %v886, 1.0
  %v888 = vrcp.pop %v887
  %v889 = vmul.f32 %v887, %v888
  %v890 = vsub.f32 1.0, %v889
  %v891 = vmul.f32 %v888, %v890
  %v892 = vadd.f32 %v888, %v891
  %vm893 = vweird.f32 %v887
  %vm894 = vweird.f32 %v888
  %vm895 = vmor %vm893, %vm894
  %v896 = vsel %vm895, %v888, %v892
  %v897 = vand.u32 2147483647, %v887
  %vm898 = vcmp.eq.f32.partialorder %v897, 8.507059e+37
  %v899 = vand.u32 %v887, 2147483648
  %v900 = vor.u32 1.1754944e-38, %v899
  %v901 = vsel %vm898, %v900, %v896
  %v902 = vmul.f32 1.0, %v901
  %v903 = vadd.f32 %v793, %v273
  %905 = vrot.lane.b32.xlu0 %v903, 88
  %v906 = vpop.permute.xlu0 %905
  %v908 = vmul.f32 %v902, %v906
  %910 = vrot.lane.b32.xlu0 %v908, 40
  %v911 = vpop.permute.xlu0 %910
  %v913 = vadd.f32 %v881, %v911
  %v914 = vtanh.pop %v913
  %v915 = vsub.f32 %v769, %v914
  %917 = vrot.lane.b32.xlu0 %v915, 108
  %v918 = vpop.permute.xlu0 %917
  %v920 = vmul.f32 %v902, %v918
  %922 = vrot.lane.b32.xlu0 %v920, 20
  %v923 = vpop.permute.xlu0 %922
  %v925 = vadd.f32 %v914, %v923
  %927 = vrot.lane.b32.xlu0 %v925, 88
  %v928 = vpop.permute.xlu0 %927
  %v929 = vsel %vm44, %v928, 0
  %931 = vmatpush.msra.mxu0 0.0
  %932 = vmatpush.msra.mxu0 0.0
  %933 = vmatpush.msra.mxu0 0.0
  %934 = vmatpush.msra.mxu0 0.0
  %935 = vmatpush.msra.mxu0 0.0
  %936 = vmatpush.msra.mxu0 0.0
  %937 = vmatpush.msra.mxu0 0.0
  %938 = vmatpush.msra.mxu0 0.0
  %939 = vmatpush.msra.mxu0 0.0
  %940 = vmatpush.msra.mxu0 0.0
  %941 = vmatpush.msra.mxu0 0.0
  %942 = vmatpush.msra.mxu0 0.0
  %943 = vmatpush.msra.mxu0 0.0
  %944 = vmatpush.msra.mxu0 %v121
  %945 = vmatpush.msra.mxu0 %v30
  %946 = vmatpush.msra.mxu0 %v29
  %947 = vmatmul.f32.gmra.mxu0 %v929
  %v948 = vpop.f32.mrf.mxu0
  %v949 = vadd.f32 0.0, %v948
  %950 = vdwg.mxu0
  %951 = vmatpush.msra.mxu0 0.0
  %952 = vmatpush.msra.mxu0 0.0
  %953 = vmatpush.msra.mxu0 0.0
  %954 = vmatpush.msra.mxu0 0.0
  %955 = vmatpush.msra.mxu0 0.0
  %956 = vmatpush.msra.mxu0 0.0
  %957 = vmatpush.msra.mxu0 0.0
  %958 = vmatpush.msra.mxu0 0.0
  %959 = vmatpush.msra.mxu0 0.0
  %960 = vmatpush.msra.mxu0 0.0
  %961 = vmatpush.msra.mxu0 0.0
  %962 = vmatpush.msra.mxu0 0.0
  %963 = vmatpush.msra.mxu0 0.0
  %964 = vmatpush.msra.mxu0 %v147
  %965 = vmatpush.msra.mxu0 %v22
  %966 = vmatpush.msra.mxu0 %v21
  %967 = vmatmul.f32.gmra.mxu0 %v861
  %v968 = vpop.f32.mrf.mxu0
  %v969 = vadd.f32 0.0, %v968
  %970 = vdwg.mxu0
  %v971 = vadd.f32 %v106, %v969
  %v972 = vxor.u32 %v971, 2147483648
  %v973 = vmul.f32 %v972, 1.442695
  %v974 = vpow.pop %v973
  %v975 = vadd.f32 %v974, 1.0
  %v976 = vrcp.pop %v975
  %v977 = vmul.f32 %v975, %v976
  %v978 = vsub.f32 1.0, %v977
  %v979 = vmul.f32 %v976, %v978
  %v980 = vadd.f32 %v976, %v979
  %vm981 = vweird.f32 %v975
  %vm982 = vweird.f32 %v976
  %vm983 = vmor %vm981, %vm982
  %v984 = vsel %vm983, %v976, %v980
  %v985 = vand.u32 2147483647, %v975
  %vm986 = vcmp.eq.f32.partialorder %v985, 8.507059e+37
  %v987 = vand.u32 %v975, 2147483648
  %v988 = vor.u32 1.1754944e-38, %v987
  %v989 = vsel %vm986, %v988, %v984
  %v990 = vmul.f32 1.0, %v989
  %v991 = vadd.f32 %v969, %v192
  %993 = vrot.lane.b32.xlu0 %v991, 88
  %v994 = vpop.permute.xlu0 %993
  %v996 = vmul.f32 %v990, %v994
  %998 = vrot.lane.b32.xlu0 %v996, 40
  %v999 = vpop.permute.xlu0 %998
  %v1001 = vadd.f32 %v106, %v999
  %v1002 = vtanh.pop %v1001
  %v1003 = vsub.f32 %v857, %v1002
  %1005 = vrot.lane.b32.xlu0 %v1003, 108
  %v1006 = vpop.permute.xlu0 %1005
  %v1008 = vmul.f32 %v990, %v1006
  %1010 = vrot.lane.b32.xlu0 %v1008, 20
  %v1011 = vpop.permute.xlu0 %1010
  %v1013 = vadd.f32 %v1002, %v1011
  %1015 = vrot.lane.b32.xlu0 %v1013, 88
  %v1016 = vpop.permute.xlu0 %1015
  %v1017 = vsel %vm44, %v1016, 0
  %1019 = vmatpush.msra.mxu0 0.0
  %1020 = vmatpush.msra.mxu0 0.0
  %1021 = vmatpush.msra.mxu0 0.0
  %1022 = vmatpush.msra.mxu0 0.0
  %1023 = vmatpush.msra.mxu0 0.0
  %1024 = vmatpush.msra.mxu0 0.0
  %1025 = vmatpush.msra.mxu0 0.0
  %1026 = vmatpush.msra.mxu0 0.0
  %1027 = vmatpush.msra.mxu0 0.0
  %1028 = vmatpush.msra.mxu0 0.0
  %1029 = vmatpush.msra.mxu0 0.0
  %1030 = vmatpush.msra.mxu0 0.0
  %1031 = vmatpush.msra.mxu0 0.0
  %1032 = vmatpush.msra.mxu0 %v228
  %1033 = vmatpush.msra.mxu0 %v26
  %1034 = vmatpush.msra.mxu0 %v25
  %1035 = vmatmul.f32.gmra.mxu0 %v1017
  %v1036 = vpop.f32.mrf.mxu0
  %v1037 = vadd.f32 %v221, %v1036
  %1038 = vdwg.mxu0
  %v1039 = vadd.f32 %v1037, %v949
  %v1040 = vxor.u32 %v1039, 2147483648
  %v1041 = vmul.f32 %v1040, 1.442695
  %v1042 = vpow.pop %v1041
  %v1043 = vadd.f32 %v1042, 1.0
  %v1044 = vrcp.pop %v1043
  %v1045 = vmul.f32 %v1043, %v1044
  %v1046 = vsub.f32 1.0, %v1045
  %v1047 = vmul.f32 %v1044, %v1046
  %v1048 = vadd.f32 %v1044, %v1047
  %vm1049 = vweird.f32 %v1043
  %vm1050 = vweird.f32 %v1044
  %vm1051 = vmor %vm1049, %vm1050
  %v1052 = vsel %vm1051, %v1044, %v1048
  %v1053 = vand.u32 2147483647, %v1043
  %vm1054 = vcmp.eq.f32.partialorder %v1053, 8.507059e+37
  %v1055 = vand.u32 %v1043, 2147483648
  %v1056 = vor.u32 1.1754944e-38, %v1055
  %v1057 = vsel %vm1054, %v1056, %v1052
  %v1058 = vmul.f32 1.0, %v1057
  %v1059 = vadd.f32 %v949, %v273
  %1061 = vrot.lane.b32.xlu0 %v1059, 88
  %v1062 = vpop.permute.xlu0 %1061
  %v1064 = vmul.f32 %v1058, %v1062
  %1066 = vrot.lane.b32.xlu0 %v1064, 40
  %v1067 = vpop.permute.xlu0 %1066
  %v1069 = vadd.f32 %v1037, %v1067
  %v1070 = vtanh.pop %v1069
  %v1071 = vsub.f32 %v925, %v1070
  %1073 = vrot.lane.b32.xlu0 %v1071, 108
  %v1074 = vpop.permute.xlu0 %1073
  %v1076 = vmul.f32 %v1058, %v1074
  %1078 = vrot.lane.b32.xlu0 %v1076, 20
  %v1079 = vpop.permute.xlu0 %1078
  %v1081 = vadd.f32 %v1070, %v1079
  %1083 = vrot.lane.b32.xlu0 %v1081, 88
  %v1084 = vpop.permute.xlu0 %1083
  %v1085 = vsel %vm44, %v1084, 0
  %1087 = vmatpush.msra.mxu0 0.0
  %1088 = vmatpush.msra.mxu0 0.0
  %1089 = vmatpush.msra.mxu0 0.0
  %1090 = vmatpush.msra.mxu0 0.0
  %1091 = vmatpush.msra.mxu0 0.0
  %1092 = vmatpush.msra.mxu0 0.0
  %1093 = vmatpush.msra.mxu0 0.0
  %1094 = vmatpush.msra.mxu0 0.0
  %1095 = vmatpush.msra.mxu0 0.0
  %1096 = vmatpush.msra.mxu0 0.0
  %1097 = vmatpush.msra.mxu0 0.0
  %1098 = vmatpush.msra.mxu0 0.0
  %1099 = vmatpush.msra.mxu0 0.0
  %1100 = vmatpush.msra.mxu0 %v121
  %1101 = vmatpush.msra.mxu0 %v30
  %1102 = vmatpush.msra.mxu0 %v29
  %1103 = vmatmul.f32.gmra.mxu0 %v1085
  %v1104 = vpop.f32.mrf.mxu0
  %v1105 = vadd.f32 0.0, %v1104
  %1106 = vdwg.mxu0
  %1107 = vmatpush.msra.mxu0 0.0
  %1108 = vmatpush.msra.mxu0 0.0
  %1109 = vmatpush.msra.mxu0 0.0
  %1110 = vmatpush.msra.mxu0 0.0
  %1111 = vmatpush.msra.mxu0 0.0
  %1112 = vmatpush.msra.mxu0 0.0
  %1113 = vmatpush.msra.mxu0 0.0
  %1114 = vmatpush.msra.mxu0 0.0
  %1115 = vmatpush.msra.mxu0 0.0
  %1116 = vmatpush.msra.mxu0 0.0
  %1117 = vmatpush.msra.mxu0 0.0
  %1118 = vmatpush.msra.mxu0 0.0
  %1119 = vmatpush.msra.mxu0 0.0
  %1120 = vmatpush.msra.mxu0 %v147
  %1121 = vmatpush.msra.mxu0 %v22
  %1122 = vmatpush.msra.mxu0 %v21
  %1123 = vmatmul.f32.gmra.mxu0 %v1017
  %v1124 = vpop.f32.mrf.mxu0
  %v1125 = vadd.f32 0.0, %v1124
  %1126 = vdwg.mxu0
  %v1127 = vadd.f32 %v109, %v1125
  %v1128 = vxor.u32 %v1127, 2147483648
  %v1129 = vmul.f32 %v1128, 1.442695
  %v1130 = vpow.pop %v1129
  %v1131 = vadd.f32 %v1130, 1.0
  %v1132 = vrcp.pop %v1131
  %v1133 = vmul.f32 %v1131, %v1132
  %v1134 = vsub.f32 1.0, %v1133
  %v1135 = vmul.f32 %v1132, %v1134
  %v1136 = vadd.f32 %v1132, %v1135
  %vm1137 = vweird.f32 %v1131
  %vm1138 = vweird.f32 %v1132
  %vm1139 = vmor %vm1137, %vm1138
  %v1140 = vsel %vm1139, %v1132, %v1136
  %v1141 = vand.u32 2147483647, %v1131
  %vm1142 = vcmp.eq.f32.partialorder %v1141, 8.507059e+37
  %v1143 = vand.u32 %v1131, 2147483648
  %v1144 = vor.u32 1.1754944e-38, %v1143
  %v1145 = vsel %vm1142, %v1144, %v1140
  %v1146 = vmul.f32 1.0, %v1145
  %v1147 = vadd.f32 %v1125, %v192
  %1149 = vrot.lane.b32.xlu0 %v1147, 88
  %v1150 = vpop.permute.xlu0 %1149
  %v1152 = vmul.f32 %v1146, %v1150
  %1154 = vrot.lane.b32.xlu0 %v1152, 40
  %v1155 = vpop.permute.xlu0 %1154
  %v1157 = vadd.f32 %v109, %v1155
  %v1158 = vtanh.pop %v1157
  %v1159 = vsub.f32 %v1013, %v1158
  %1161 = vrot.lane.b32.xlu0 %v1159, 108
  %v1162 = vpop.permute.xlu0 %1161
  %v1164 = vmul.f32 %v1146, %v1162
  %1166 = vrot.lane.b32.xlu0 %v1164, 20
  %v1167 = vpop.permute.xlu0 %1166
  %v1169 = vadd.f32 %v1158, %v1167
  %1171 = vrot.lane.b32.xlu0 %v1169, 88
  %v1172 = vpop.permute.xlu0 %1171
  %v1173 = vsel %vm44, %v1172, 0
  %1175 = vmatpush.msra.mxu0 0.0
  %1176 = vmatpush.msra.mxu0 0.0
  %1177 = vmatpush.msra.mxu0 0.0
  %1178 = vmatpush.msra.mxu0 0.0
  %1179 = vmatpush.msra.mxu0 0.0
  %1180 = vmatpush.msra.mxu0 0.0
  %1181 = vmatpush.msra.mxu0 0.0
  %1182 = vmatpush.msra.mxu0 0.0
  %1183 = vmatpush.msra.mxu0 0.0
  %1184 = vmatpush.msra.mxu0 0.0
  %1185 = vmatpush.msra.mxu0 0.0
  %1186 = vmatpush.msra.mxu0 0.0
  %1187 = vmatpush.msra.mxu0 0.0
  %1188 = vmatpush.msra.mxu0 %v228
  %1189 = vmatpush.msra.mxu0 %v26
  %1190 = vmatpush.msra.mxu0 %v25
  %1191 = vmatmul.f32.gmra.mxu0 %v1173
  %v1192 = vpop.f32.mrf.mxu0
  %v1193 = vadd.f32 %v221, %v1192
  %1194 = vdwg.mxu0
  %v1195 = vadd.f32 %v1193, %v1105
  %v1196 = vxor.u32 %v1195, 2147483648
  %v1197 = vmul.f32 %v1196, 1.442695
  %v1198 = vpow.pop %v1197
  %v1199 = vadd.f32 %v1198, 1.0
  %v1200 = vrcp.pop %v1199
  %v1201 = vmul.f32 %v1199, %v1200
  %v1202 = vsub.f32 1.0, %v1201
  %v1203 = vmul.f32 %v1200, %v1202
  %v1204 = vadd.f32 %v1200, %v1203
  %vm1205 = vweird.f32 %v1199
  %vm1206 = vweird.f32 %v1200
  %vm1207 = vmor %vm1205, %vm1206
  %v1208 = vsel %vm1207, %v1200, %v1204
  %v1209 = vand.u32 2147483647, %v1199
  %vm1210 = vcmp.eq.f32.partialorder %v1209, 8.507059e+37
  %v1211 = vand.u32 %v1199, 2147483648
  %v1212 = vor.u32 1.1754944e-38, %v1211
  %v1213 = vsel %vm1210, %v1212, %v1208
  %v1214 = vmul.f32 1.0, %v1213
  %v1215 = vadd.f32 %v1105, %v273
  %1217 = vrot.lane.b32.xlu0 %v1215, 88
  %v1218 = vpop.permute.xlu0 %1217
  %v1220 = vmul.f32 %v1214, %v1218
  %1222 = vrot.lane.b32.xlu0 %v1220, 40
  %v1223 = vpop.permute.xlu0 %1222
  %v1225 = vadd.f32 %v1193, %v1223
  %v1226 = vtanh.pop %v1225
  %v1227 = vsub.f32 %v1081, %v1226
  %1229 = vrot.lane.b32.xlu0 %v1227, 108
  %v1230 = vpop.permute.xlu0 %1229
  %v1232 = vmul.f32 %v1214, %v1230
  %1234 = vrot.lane.b32.xlu0 %v1232, 20
  %v1235 = vpop.permute.xlu0 %1234
  %v1237 = vadd.f32 %v1226, %v1235
  %1239 = vrot.lane.b32.xlu0 %v1237, 88
  %v1240 = vpop.permute.xlu0 %1239
  %v1241 = vsel %vm44, %v1240, 0
  %1243 = vmatpush.msra.mxu0 0.0
  %1244 = vmatpush.msra.mxu0 0.0
  %1245 = vmatpush.msra.mxu0 0.0
  %1246 = vmatpush.msra.mxu0 0.0
  %1247 = vmatpush.msra.mxu0 0.0
  %1248 = vmatpush.msra.mxu0 0.0
  %1249 = vmatpush.msra.mxu0 0.0
  %1250 = vmatpush.msra.mxu0 0.0
  %1251 = vmatpush.msra.mxu0 0.0
  %1252 = vmatpush.msra.mxu0 0.0
  %1253 = vmatpush.msra.mxu0 0.0
  %1254 = vmatpush.msra.mxu0 0.0
  %1255 = vmatpush.msra.mxu0 0.0
  %1256 = vmatpush.msra.mxu0 %v121
  %1257 = vmatpush.msra.mxu0 %v30
  %1258 = vmatpush.msra.mxu0 %v29
  %1259 = vmatmul.f32.gmra.mxu0 %v1241
  %v1260 = vpop.f32.mrf.mxu0
  %v1261 = vadd.f32 0.0, %v1260
  %1262 = vdwg.mxu0
  %1263 = vmatpush.msra.mxu0 0.0
  %1264 = vmatpush.msra.mxu0 0.0
  %1265 = vmatpush.msra.mxu0 0.0
  %1266 = vmatpush.msra.mxu0 0.0
  %1267 = vmatpush.msra.mxu0 0.0
  %1268 = vmatpush.msra.mxu0 0.0
  %1269 = vmatpush.msra.mxu0 0.0
  %1270 = vmatpush.msra.mxu0 0.0
  %1271 = vmatpush.msra.mxu0 0.0
  %1272 = vmatpush.msra.mxu0 0.0
  %1273 = vmatpush.msra.mxu0 0.0
  %1274 = vmatpush.msra.mxu0 0.0
  %1275 = vmatpush.msra.mxu0 0.0
  %1276 = vmatpush.msra.mxu0 %v147
  %1277 = vmatpush.msra.mxu0 %v22
  %1278 = vmatpush.msra.mxu0 %v21
  %1279 = vmatmul.f32.gmra.mxu0 %v1173
  %v1280 = vpop.f32.mrf.mxu0
  %v1281 = vadd.f32 0.0, %v1280
  %1282 = vdwg.mxu0
  %v1283 = vadd.f32 %v112, %v1281
  %v1284 = vxor.u32 %v1283, 2147483648
  %v1285 = vmul.f32 %v1284, 1.442695
  %v1286 = vpow.pop %v1285
  %v1287 = vadd.f32 %v1286, 1.0
  %v1288 = vrcp.pop %v1287
  %v1289 = vmul.f32 %v1287, %v1288
  %v1290 = vsub.f32 1.0, %v1289
  %v1291 = vmul.f32 %v1288, %v1290
  %v1292 = vadd.f32 %v1288, %v1291
  %vm1293 = vweird.f32 %v1287
  %vm1294 = vweird.f32 %v1288
  %vm1295 = vmor %vm1293, %vm1294
  %v1296 = vsel %vm1295, %v1288, %v1292
  %v1297 = vand.u32 2147483647, %v1287
  %vm1298 = vcmp.eq.f32.partialorder %v1297, 8.507059e+37
  %v1299 = vand.u32 %v1287, 2147483648
  %v1300 = vor.u32 1.1754944e-38, %v1299
  %v1301 = vsel %vm1298, %v1300, %v1296
  %v1302 = vmul.f32 1.0, %v1301
  %v1303 = vadd.f32 %v1281, %v192
  %1305 = vrot.lane.b32.xlu0 %v1303, 88
  %v1306 = vpop.permute.xlu0 %1305
  %v1308 = vmul.f32 %v1302, %v1306
  %1310 = vrot.lane.b32.xlu0 %v1308, 40
  %v1311 = vpop.permute.xlu0 %1310
  %v1313 = vadd.f32 %v112, %v1311
  %v1314 = vtanh.pop %v1313
  %v1315 = vsub.f32 %v1169, %v1314
  %1317 = vrot.lane.b32.xlu0 %v1315, 108
  %v1318 = vpop.permute.xlu0 %1317
  %v1320 = vmul.f32 %v1302, %v1318
  %1322 = vrot.lane.b32.xlu0 %v1320, 20
  %v1323 = vpop.permute.xlu0 %1322
  %v1325 = vadd.f32 %v1314, %v1323
  %1327 = vrot.lane.b32.xlu0 %v1325, 88
  %v1328 = vpop.permute.xlu0 %1327
  %v1329 = vsel %vm44, %v1328, 0
  %1331 = vmatpush.msra.mxu0 0.0
  %1332 = vmatpush.msra.mxu0 0.0
  %1333 = vmatpush.msra.mxu0 0.0
  %1334 = vmatpush.msra.mxu0 0.0
  %1335 = vmatpush.msra.mxu0 0.0
  %1336 = vmatpush.msra.mxu0 0.0
  %1337 = vmatpush.msra.mxu0 0.0
  %1338 = vmatpush.msra.mxu0 0.0
  %1339 = vmatpush.msra.mxu0 0.0
  %1340 = vmatpush.msra.mxu0 0.0
  %1341 = vmatpush.msra.mxu0 0.0
  %1342 = vmatpush.msra.mxu0 0.0
  %1343 = vmatpush.msra.mxu0 0.0
  %1344 = vmatpush.msra.mxu0 %v228
  %1345 = vmatpush.msra.mxu0 %v26
  %1346 = vmatpush.msra.mxu0 %v25
  %1347 = vmatmul.f32.gmra.mxu0 %v1329
  %v1348 = vpop.f32.mrf.mxu0
  %v1349 = vadd.f32 %v221, %v1348
  %1350 = vdwg.mxu0
  %v1351 = vadd.f32 %v1349, %v1261
  %v1352 = vxor.u32 %v1351, 2147483648
  %v1353 = vmul.f32 %v1352, 1.442695
  %v1354 = vpow.pop %v1353
  %v1355 = vadd.f32 %v1354, 1.0
  %v1356 = vrcp.pop %v1355
  %v1357 = vmul.f32 %v1355, %v1356
  %v1358 = vsub.f32 1.0, %v1357
  %v1359 = vmul.f32 %v1356, %v1358
  %v1360 = vadd.f32 %v1356, %v1359
  %vm1361 = vweird.f32 %v1355
  %vm1362 = vweird.f32 %v1356
  %vm1363 = vmor %vm1361, %vm1362
  %v1364 = vsel %vm1363, %v1356, %v1360
  %v1365 = vand.u32 2147483647, %v1355
  %vm1366 = vcmp.eq.f32.partialorder %v1365, 8.507059e+37
  %v1367 = vand.u32 %v1355, 2147483648
  %v1368 = vor.u32 1.1754944e-38, %v1367
  %v1369 = vsel %vm1366, %v1368, %v1364
  %v1370 = vmul.f32 1.0, %v1369
  %v1371 = vadd.f32 %v1261, %v273
  %1373 = vrot.lane.b32.xlu0 %v1371, 88
  %v1374 = vpop.permute.xlu0 %1373
  %v1376 = vmul.f32 %v1370, %v1374
  %1378 = vrot.lane.b32.xlu0 %v1376, 40
  %v1379 = vpop.permute.xlu0 %1378
  %v1381 = vadd.f32 %v1349, %v1379
  %v1382 = vtanh.pop %v1381
  %v1383 = vsub.f32 %v1237, %v1382
  %1385 = vrot.lane.b32.xlu0 %v1383, 108
  %v1386 = vpop.permute.xlu0 %1385
  %v1388 = vmul.f32 %v1370, %v1386
  %1390 = vrot.lane.b32.xlu0 %v1388, 20
  %v1391 = vpop.permute.xlu0 %1390
  %v1393 = vadd.f32 %v1382, %v1391
  %1395 = vst.msk [vmem:[%s4] sm:$0xff] %vm44, %v1328
  %1397 = vrot.lane.b32.xlu0 %v1393, 88
  %v1398 = vpop.permute.xlu0 %1397
  %s1400 = scalar_lea.vmem %s4, 8
  %1401 = vst.msk [vmem:[%s1400] sm:$0xff] %vm44, %v1398
  // Predicated region
  $region18: #{gru_model_forward.1} parent=0 // pred_check
    _
  $region19: #{gru_model_forward.1} parent=0 // pred_check_branch
    %1403 = sbr.rel (0) target = $region21
  $region20: #{gru_model_forward.1} parent=0 // pred_region
    _
  $region21: #{gru_model_forward.1} parent=0 // pred_fallthru
    _
  // Predicated region
  $region22: #{gru_model_forward.1} parent=0 // pred_check
    _
  $region23: #{gru_model_forward.1} parent=0 // pred_check_branch
    %1405 = sbr.rel (0) target = $region25
  $region24: #{gru_model_forward.1} parent=0 // pred_region
    _
  $region25: #{gru_model_forward.1} parent=0 // pred_fallthru
    _

</llo_original>
